<compile_context>
chip_gen: v7x
topology: tpu7x:2x2x1
jax: 0.10.0
libtpu: 0.0.40
codegen_flags: <defaults>
</compile_context>

<pallas_src>
import numpy as np
import jax
import jax.numpy as jnp
from jax import lax
from jax.experimental import pallas as pl
from jax.experimental.pallas import tpu as pltpu


def _make_crf_kernel(C, C8, D, TL, TB, NL):
    TG = TL // 4           # 4 timesteps per packed backtrack word

    def kernel(x_ref, w_ref, tb_ref, stop_ref, m_ref,
               bt_ref, last_ref, best_ref, emis_ref):
        lc = pl.program_id(1)  # sequence-chunk index (sequential axis)

        @pl.when(lc == 0)
        def _init():
            # torch: best_scores = zeros_like(x[:, 0, :])
            best_ref[...] = jnp.zeros_like(best_ref)

        # ---- emissions for this chunk: bf16 MXU matmuls staged in VMEM ----
        # Sub-slabs of 8 timesteps bound the live dot result to 8 vregs.
        ES = 8 * TB
        for s in range(TL // 8):
            emis_ref[:, s * ES:(s + 1) * ES] = jnp.dot(
                w_ref[...], x_ref[0, :, s * ES:(s + 1) * ES],
                preferred_element_type=jnp.float32)

        trans_b = tb_ref[...]            # (C8, C8, TB) f32, bias pre-folded

        def step(best, t):
            # max / argmax over the "from" axis as a VPU-only select chain.
            val = best[0:1, :] + trans_b[0]                    # (C8, TB)
            idx = jnp.zeros((C8, TB), jnp.int32)
            for i in range(1, C):
                cand = best[i:i + 1, :] + trans_b[i]
                upd = cand > val         # strict ">" => first-occurrence argmax
                idx = jnp.where(upd, jnp.int32(i), idx)
                val = jnp.where(upd, cand, val)
            off = pl.multiple_of(t * TB, TB)
            new = val + emis_ref[:, pl.ds(off, TB)]            # VMEM-staged emis
            m_t = m_ref[0, pl.ds(t, 1), :] != 0                # (1, TB)
            best = jnp.where(m_t, new, best)                   # single select
            return best, idx

        def group(g, best):
            base = g * 4
            packed = jnp.zeros((C8, TB), jnp.int32)
            for k in range(4):           # unroll-by-4 inside the fori_loop body
                best, idx = step(best, base + k)
                packed = packed | (idx << (8 * k))             # 4 x u8 -> i32
            # Unmasked (8,128) int32 store, lane-dense (batch on lanes).
            bt_ref[0, pl.ds(g, 1), :, :] = packed.reshape(1, C8, TB)
            return best

        best = lax.fori_loop(0, TG, group, best_ref[...], unroll=2)
        best_ref[...] = best

        @pl.when(lc == NL - 1)
        def _finalize():
            fin = best + stop_ref[...]                         # (C8, TB)
            lv = fin[0:1, :]
            lidx = jnp.zeros((1, TB), jnp.int32)
            for j in range(1, C):
                cand = fin[j:j + 1, :]
                upd = cand > lv
                lidx = jnp.where(upd, jnp.int32(j), lidx)
                lv = jnp.where(upd, cand, lv)
            last_ref[...] = lidx

    return kernel


def crf_forward_pallas(x, mask, w, b, trans):
    """CRF.forward.

    x: (B, L, D) f32 features, mask: (B, L) bool, w: (C, D) f32 (nn.Linear
    weight, out x in), b: (C,) f32, trans: (C, C) f32.
    Returns (B, L) int32 best tag paths (dropout is identity at inference).
    """
    B, L, D = x.shape
    C = trans.shape[0]
    C8 = max(8, -(-C // 8) * 8)            # pad tag axis to full sublane tiles
    stop_idx = C - 1

    TB = 128                               # batch tile = lane width
    TL = max(8, min(128, -(-L // 8) * 8))  # seq chunk (multiple of 8 and of 4)
    TG = TL // 4
    NB = -(-B // TB)
    NL = -(-L // TL)
    B_pad, L_pad = NB * TB, NL * TL

    # ---- wrapper-side layout plumbing (bf16 first; batch -> lanes) ----
    # TODO(synk): ideally the producing layer emits x directly in this layout
    # (and the mask as int8) so this extra HBM round trip disappears entirely.
    x_bf = x.astype(jnp.bfloat16)
    x_p = jnp.zeros((B_pad, L_pad, D), jnp.bfloat16).at[:B, :L, :].set(x_bf)
    x_arr = (x_p.reshape(NB, TB, NL, TL, D)
                .transpose(2, 4, 0, 3, 1)              # (NL, D, NB, TL, TB)
                .reshape(NL, D, NB * TL * TB))
    mask_p = jnp.zeros((B_pad, L_pad), jnp.int32).at[:B, :L].set(
        mask.astype(jnp.int32))
    mask_arr = (mask_p.reshape(NB, TB, NL, TL)
                      .transpose(2, 3, 0, 1)            # (NL, TL, NB, TB)
                      .reshape(NL, TL, NB * TB))

    # W rows padded to C8, bias folded into the transition matrix (free on host;
    # per-to-tag constant added at every masked timestep => identical decode).
    w8 = jnp.zeros((C8, D), jnp.bfloat16).at[:C, :].set(w.astype(jnp.bfloat16))
    tf = trans.astype(jnp.float32) + b.astype(jnp.float32)[None, :]   # (C, C)
    tf8 = jnp.zeros((C8, C8), jnp.float32).at[:C, :C].set(tf)
    trans_b = jnp.broadcast_to(tf8[:, :, None], (C8, C8, TB))
    stop8 = jnp.zeros((C8,), jnp.float32).at[:C].set(
        trans[:, stop_idx].astype(jnp.float32))
    stop_b = jnp.broadcast_to(stop8[:, None], (C8, TB))

    kernel = _make_crf_kernel(C, C8, D, TL, TB, NL)

    # VMEM budget (double-buffered in/out blocks + scratch) -- a few MiB on all
    # of v5e / v6e / v7x, so no generation-specific chunk capping is needed.
    vmem_need = (2 * (D * TL * TB * 2)          # x blocks (bf16)
                 + 2 * (TL * TB * 4)            # mask blocks
                 + 2 * (TG * C8 * TB * 4)       # packed backtrack blocks
                 + 2 * (C8 * D * 2 + C8 * C8 * TB * 4 + C8 * TB * 4 + TB * 4)
                 + C8 * TL * TB * 4             # emission scratch
                 + C8 * TB * 4)                 # Viterbi state scratch
    vmem_limit = int(min(32 * 2**20, max(16 * 2**20, 2 * vmem_need)))

    # TODO(synk): on v7x with NB == 1 the second TensorCore is idle; a
    # split-sequence + O(C^2) max-plus merge scheme would recover it.
    # TODO(synk): on v5e, if the x DMA becomes exposed at large TL, bump the x
    # BlockSpec to pipeline_mode=pl.Buffered(3).
    bt_arr, last_arr = pl.pallas_call(
        kernel,
        grid=(NB, NL),
        in_specs=[
            pl.BlockSpec((1, D, TL * TB), lambda bi, lc: (lc, 0, bi)),
            pl.BlockSpec((C8, D), lambda bi, lc: (0, 0)),
            pl.BlockSpec((C8, C8, TB), lambda bi, lc: (0, 0, 0)),
            pl.BlockSpec((C8, TB), lambda bi, lc: (0, 0)),
            pl.BlockSpec((1, TL, TB), lambda bi, lc: (lc, 0, bi)),
        ],
        out_specs=[
            pl.BlockSpec((1, TG, C8, TB), lambda bi, lc: (lc, 0, 0, bi)),
            pl.BlockSpec((1, TB), lambda bi, lc: (0, bi)),
        ],
        out_shape=(
            jax.ShapeDtypeStruct((NL, TG, C8, NB * TB), jnp.int32),
            jax.ShapeDtypeStruct((1, NB * TB), jnp.int32),
        ),
        scratch_shapes=[pltpu.VMEM((C8, TB), jnp.float32),        # Viterbi state
                        pltpu.VMEM((C8, TL * TB), jnp.float32)],  # staged emis
        compiler_params=pltpu.CompilerParams(
            dimension_semantics=("parallel", "arbitrary"),
            vmem_limit_bytes=vmem_limit,
        ),
    )(x_arr, w8, trans_b, stop_b, mask_arr)

    # Unpack the 4-timestep int32 words and restore (B, L, C) for the glue.
    shifts = (jnp.arange(4, dtype=jnp.int32) * 8)
    bt_bytes = (bt_arr[:, :, None, :, :] >>
                shifts[None, None, :, None, None]) & 0xFF        # (NL,TG,4,C8,NB*TB)
    bt = (bt_bytes.reshape(NL, TL, C8, NB, TB)
                  .transpose(3, 4, 0, 1, 2)                      # (NB,TB,NL,TL,C8)
                  .reshape(B_pad, L_pad, C8)[:B, :L, :C]).astype(jnp.int32)
    last_tags = last_arr[0, :B]
    seq_len = jnp.sum(mask.astype(jnp.int32), axis=-1)
    return _backtrack_paths(bt, last_tags, seq_len)


def _backtrack_paths(backtrack, best_last_tags, seq_len):
    # TODO(synk): per-sample backtracking is inherently sequential scalar
    # gathering; kept in plain JAX (lax.scan) rather than in the kernel.
    B, L, C = backtrack.shape
    batch_idx = jnp.arange(B)

    def step(cur_tag, l):
        lp1 = jnp.minimum(l + 1, L - 1)
        prev_from_bt = backtrack[batch_idx, lp1, cur_tag]
        is_last = (l == seq_len - 1)
        in_body = (l < seq_len - 1)
        new_tag = jnp.where(is_last, best_last_tags,
                            jnp.where(in_body, prev_from_bt, cur_tag))
        out = jnp.where(l < seq_len, new_tag, 0)
        return new_tag, out

    ls = jnp.arange(L - 1, -1, -1)
    _, outs = jax.lax.scan(step, jnp.zeros((B,), jnp.int32), ls)
    return outs[::-1].T.astype(jnp.int32)    # (B, L)


def _ref_decode(emis_nobias, mask, trans, bias, stop_idx):
    """Numpy re-implementation of CRF._viterbi_decode with the fc bias folded
    into the transitions exactly as the kernel does (algebraically identical
    to the torch reference) and first-occurrence argmax semantics."""
    emis = np.asarray(emis_nobias, np.float32)
    mask = np.asarray(mask)
    trans = np.asarray(trans, np.float32)
    bias = np.asarray(bias, np.float32)
    tf = trans + bias[None, :]                       # (C_from, C_to)
    B, L, C = emis.shape
    best = np.zeros((B, C), np.float32)
    bt = np.zeros((B, L, C), np.int64)
    for l in range(L):
        val = best[:, 0:1] + tf[0][None, :]
        idx = np.zeros((B, C), np.int64)
        for i in range(1, C):
            cand = best[:, i:i + 1] + tf[i][None, :]
            upd = cand > val
            idx = np.where(upd, i, idx)
            val = np.where(upd, cand, val)
        bt[:, l, :] = idx
        new = val + emis[:, l, :]
        m = mask[:, l][:, None]
        best = np.where(m, new, best)
    best = best + trans[:, stop_idx][None, :]
    lv = best[:, 0].copy()
    last = np.zeros((B,), np.int64)
    for j in range(1, C):
        upd = best[:, j] > lv
        last = np.where(upd, j, last)
        lv = np.where(upd, best[:, j], lv)
    seq_len = mask.sum(-1).astype(np.int64)
    paths = []
    for bi in range(B):
        tl = int(seq_len[bi])
        cur = int(last[bi])
        bp = [cur] if tl > 0 else []
        for l in range(tl - 1, 0, -1):
            cur = int(bt[bi, l, cur])
            bp.append(cur)
        bp.reverse()
        bp += [0] * (L - tl)
        paths.append(bp)
    return np.array(paths, np.int32)


if __name__ == "__main__":
    # Module config: input_dim=32, num_class=5, dropout=0.1 -> C = 5 + 2 = 7
    B, L, D = 2, 8, 32
    num_class = 5
    C = num_class + 2
    start_idx, stop_idx = C - 2, C - 1

    key = jax.random.PRNGKey(0)
    kx, kw, kb, kt = jax.random.split(key, 4)

    x = jax.random.normal(kx, (B, L, D), dtype=jnp.float32)
    lengths = jnp.array([8, 5], dtype=jnp.int32)
    mask = (jnp.arange(L)[None, :] < lengths[:, None])

    # Deterministic synthetic parameters (dropout = identity at inference).
    w = jax.random.normal(kw, (C, D), dtype=jnp.float32) * 0.1     # Linear weight
    b = jax.random.normal(kb, (C,), dtype=jnp.float32) * 0.1       # Linear bias
    trans = jax.random.normal(kt, (C, C), dtype=jnp.float32)
    trans = trans.at[start_idx, :].set(-1.0)
    trans = trans.at[:, stop_idx].set(-1.0)

    paths = crf_forward_pallas(x, mask, w, b, trans)
    paths = jax.block_until_ready(paths)

    # Reference: same bf16 fc emissions (no bias; the bias is folded into the
    # transitions in both kernel and reference), then an exact f32 Viterbi
    # decode + python backtracking in numpy.
    emis_check = jnp.dot(x.reshape(B * L, D).astype(jnp.bfloat16),
                         w.T.astype(jnp.bfloat16),
                         preferred_element_type=jnp.float32)
    emis_check = np.asarray(emis_check, np.float32).reshape(B, L, C)
    ref_paths = _ref_decode(emis_check, np.asarray(mask), np.asarray(trans),
                            np.asarray(b), stop_idx)

    assert paths.shape == (B, L), paths.shape
    assert np.array_equal(np.asarray(paths), ref_paths), (paths, ref_paths)

    print("KERNEL_OK")
</pallas_src>

<mosaic_0001>
module attributes {stable_mosaic.version = 11 : i64} {
  func.func @kernel(%arg0: i32, %arg1: i32, %arg2: memref<1x32x1024xbf16, #tpu.memory_space<vmem>>, %arg3: memref<8x32xbf16, #tpu.memory_space<vmem>>, %arg4: memref<8x8x128xf32, #tpu.memory_space<vmem>>, %arg5: memref<8x128xf32, #tpu.memory_space<vmem>>, %arg6: memref<1x8x128xi32, #tpu.memory_space<vmem>>, %arg7: memref<1x2x8x128xi32, #tpu.memory_space<vmem>>, %arg8: memref<1x128xi32, #tpu.memory_space<vmem>>, %arg9: memref<8x128xf32, #tpu.memory_space<vmem>>, %arg10: memref<8x1024xf32, #tpu.memory_space<vmem>>) attributes {dimension_semantics = [#tpu.dimension_semantics<parallel>, #tpu.dimension_semantics<arbitrary>], iteration_bounds = array<i64: 1, 1>, scalar_prefetch = 0 : i64, scratch_operands = 2 : i64, tpu.core_type = #tpu.core_type<tc>, window_params = [{transform_indices = @transform_0, window_bounds = array<i64: 1, 32, 1024>}, {pipeline_mode = #tpu.pipeline_mode<synchronous>, transform_indices = @transform_1, window_bounds = array<i64: 8, 32>}, {pipeline_mode = #tpu.pipeline_mode<synchronous>, transform_indices = @transform_2, window_bounds = array<i64: 8, 8, 128>}, {pipeline_mode = #tpu.pipeline_mode<synchronous>, transform_indices = @transform_3, window_bounds = array<i64: 8, 128>}, {transform_indices = @transform_4, window_bounds = array<i64: 1, 8, 128>}, {transform_indices = @transform_5, window_bounds = array<i64: 1, 2, 8, 128>}, {transform_indices = @transform_6, window_bounds = array<i64: 1, 128>}]} {
    %c0_i32 = arith.constant 0 : i32
    %0 = arith.cmpi eq, %arg1, %c0_i32 : i32
    %1 = arith.extui %0 : i1 to i32
    %c0_i32_0 = arith.constant 0 : i32
    %2 = arith.cmpi ne, %1, %c0_i32_0 : i32
    scf.if %2 {
      %cst_131 = arith.constant 0.000000e+00 : f32
      %644 = vector.broadcast %cst_131 : f32 to vector<8x128xf32>
      %c0_132 = arith.constant 0 : index
      %c0_133 = arith.constant 0 : index
      %645 = vector.load %arg9[%c0_132, %c0_133] : memref<8x128xf32, #tpu.memory_space<vmem>>, vector<8x128xf32>
      tpu.vector_store %arg9[%c0_132, %c0_133], %644 {strides = array<i32>} : memref<8x128xf32, #tpu.memory_space<vmem>>, vector<8x128xf32>,
    } else {
    }
    %c0 = arith.constant 0 : index
    %c0_1 = arith.constant 0 : index
    %3 = vector.load %arg3[%c0, %c0_1] : memref<8x32xbf16, #tpu.memory_space<vmem>>, vector<8x32xbf16>
    %c0_2 = arith.constant 0 : index
    %c0_3 = arith.constant 0 : index
    %c0_4 = arith.constant 0 : index
    %4 = vector.load %arg2[%c0_2, %c0_3, %c0_4] : memref<1x32x1024xbf16, #tpu.memory_space<vmem>>, vector<1x32x1024xbf16>
    %5 = vector.shape_cast %4 : vector<1x32x1024xbf16> to vector<32x1024xbf16>
    %cst = arith.constant dense<0.000000e+00> : vector<8x1024xf32>
    %6 = tpu.matmul %3, %5, %cst {dimension_numbers = #tpu.dot_dimension_numbers<[1], [0], [0], [1], [0, 0, 1, 1], [], []>} : vector<8x32xbf16>, vector<32x1024xbf16>, vector<8x1024xf32> -> vector<8x1024xf32>
    %c0_5 = arith.constant 0 : index
    %c0_6 = arith.constant 0 : index
    %7 = vector.load %arg10[%c0_5, %c0_6] : memref<8x1024xf32, #tpu.memory_space<vmem>>, vector<8x1024xf32>
    tpu.vector_store %arg10[%c0_5, %c0_6], %6 {strides = array<i32>} : memref<8x1024xf32, #tpu.memory_space<vmem>>, vector<8x1024xf32>,
    %c0_7 = arith.constant 0 : index
    %c0_8 = arith.constant 0 : index
    %c0_9 = arith.constant 0 : index
    %8 = vector.load %arg4[%c0_7, %c0_8, %c0_9] : memref<8x8x128xf32, #tpu.memory_space<vmem>>, vector<8x8x128xf32>
    %c0_10 = arith.constant 0 : index
    %c0_11 = arith.constant 0 : index
    %9 = vector.load %arg9[%c0_10, %c0_11] : memref<8x128xf32, #tpu.memory_space<vmem>>, vector<8x128xf32>
    %c0_i32_12 = arith.constant 0 : i32
    %c4_i32 = arith.constant 4 : i32
    %10 = arith.muli %c0_i32_12, %c4_i32 : i32
    %c0_i32_13 = arith.constant 0 : i32
    %11 = vector.broadcast %c0_i32_13 : i32 to vector<8x128xi32>
    %c0_i32_14 = arith.constant 0 : i32
    %12 = arith.addi %10, %c0_i32_14 : i32
    %13 = vector.extract_strided_slice %9 {offsets = [0, 0], sizes = [1, 128], strides = [1, 1]} : vector<8x128xf32> to vector<1x128xf32>
    %14 = vector.extract_strided_slice %8 {offsets = [0, 0, 0], sizes = [1, 8, 128], strides = [1, 1, 1]} : vector<8x8x128xf32> to vector<1x8x128xf32>
    %15 = vector.shape_cast %14 : vector<1x8x128xf32> to vector<8x128xf32>
    %16 = vector.broadcast %13 : vector<1x128xf32> to vector<8x128xf32>
    %17 = arith.addf %16, %15 : vector<8x128xf32>
    %c0_i32_15 = arith.constant 0 : i32
    %18 = vector.broadcast %c0_i32_15 : i32 to vector<8x128xi32>
    %19 = vector.extract_strided_slice %9 {offsets = [1, 0], sizes = [1, 128], strides = [1, 1]} : vector<8x128xf32> to vector<1x128xf32>
    %20 = vector.extract_strided_slice %8 {offsets = [1, 0, 0], sizes = [1, 8, 128], strides = [1, 1, 1]} : vector<8x8x128xf32> to vector<1x8x128xf32>
    %21 = vector.shape_cast %20 : vector<1x8x128xf32> to vector<8x128xf32>
    %22 = vector.broadcast %19 : vector<1x128xf32> to vector<8x128xf32>
    %23 = arith.addf %22, %21 : vector<8x128xf32>
    %24 = arith.cmpf ogt, %23, %17 : vector<8x128xf32>
    %c1_i32 = arith.constant 1 : i32
    %25 = vector.broadcast %c1_i32 : i32 to vector<8x128xi32>
    %26 = arith.select %24, %25, %18 : vector<8x128xi1>, vector<8x128xi32>
    %27 = arith.select %24, %23, %17 : vector<8x128xi1>, vector<8x128xf32>
    %28 = vector.extract_strided_slice %9 {offsets = [2, 0], sizes = [1, 128], strides = [1, 1]} : vector<8x128xf32> to vector<1x128xf32>
    %29 = vector.extract_strided_slice %8 {offsets = [2, 0, 0], sizes = [1, 8, 128], strides = [1, 1, 1]} : vector<8x8x128xf32> to vector<1x8x128xf32>
    %30 = vector.shape_cast %29 : vector<1x8x128xf32> to vector<8x128xf32>
    %31 = vector.broadcast %28 : vector<1x128xf32> to vector<8x128xf32>
    %32 = arith.addf %31, %30 : vector<8x128xf32>
    %33 = arith.cmpf ogt, %32, %27 : vector<8x128xf32>
    %c2_i32 = arith.constant 2 : i32
    %34 = vector.broadcast %c2_i32 : i32 to vector<8x128xi32>
    %35 = arith.select %33, %34, %26 : vector<8x128xi1>, vector<8x128xi32>
    %36 = arith.select %33, %32, %27 : vector<8x128xi1>, vector<8x128xf32>
    %37 = vector.extract_strided_slice %9 {offsets = [3, 0], sizes = [1, 128], strides = [1, 1]} : vector<8x128xf32> to vector<1x128xf32>
    %38 = vector.extract_strided_slice %8 {offsets = [3, 0, 0], sizes = [1, 8, 128], strides = [1, 1, 1]} : vector<8x8x128xf32> to vector<1x8x128xf32>
    %39 = vector.shape_cast %38 : vector<1x8x128xf32> to vector<8x128xf32>
    %40 = vector.broadcast %37 : vector<1x128xf32> to vector<8x128xf32>
    %41 = arith.addf %40, %39 : vector<8x128xf32>
    %42 = arith.cmpf ogt, %41, %36 : vector<8x128xf32>
    %c3_i32 = arith.constant 3 : i32
    %43 = vector.broadcast %c3_i32 : i32 to vector<8x128xi32>
    %44 = arith.select %42, %43, %35 : vector<8x128xi1>, vector<8x128xi32>
    %45 = arith.select %42, %41, %36 : vector<8x128xi1>, vector<8x128xf32>
    %46 = vector.extract_strided_slice %9 {offsets = [4, 0], sizes = [1, 128], strides = [1, 1]} : vector<8x128xf32> to vector<1x128xf32>
    %47 = vector.extract_strided_slice %8 {offsets = [4, 0, 0], sizes = [1, 8, 128], strides = [1, 1, 1]} : vector<8x8x128xf32> to vector<1x8x128xf32>
    %48 = vector.shape_cast %47 : vector<1x8x128xf32> to vector<8x128xf32>
    %49 = vector.broadcast %46 : vector<1x128xf32> to vector<8x128xf32>
    %50 = arith.addf %49, %48 : vector<8x128xf32>
    %51 = arith.cmpf ogt, %50, %45 : vector<8x128xf32>
    %c4_i32_16 = arith.constant 4 : i32
    %52 = vector.broadcast %c4_i32_16 : i32 to vector<8x128xi32>
    %53 = arith.select %51, %52, %44 : vector<8x128xi1>, vector<8x128xi32>
    %54 = arith.select %51, %50, %45 : vector<8x128xi1>, vector<8x128xf32>
    %55 = vector.extract_strided_slice %9 {offsets = [5, 0], sizes = [1, 128], strides = [1, 1]} : vector<8x128xf32> to vector<1x128xf32>
    %56 = vector.extract_strided_slice %8 {offsets = [5, 0, 0], sizes = [1, 8, 128], strides = [1, 1, 1]} : vector<8x8x128xf32> to vector<1x8x128xf32>
    %57 = vector.shape_cast %56 : vector<1x8x128xf32> to vector<8x128xf32>
    %58 = vector.broadcast %55 : vector<1x128xf32> to vector<8x128xf32>
    %59 = arith.addf %58, %57 : vector<8x128xf32>
    %60 = arith.cmpf ogt, %59, %54 : vector<8x128xf32>
    %c5_i32 = arith.constant 5 : i32
    %61 = vector.broadcast %c5_i32 : i32 to vector<8x128xi32>
    %62 = arith.select %60, %61, %53 : vector<8x128xi1>, vector<8x128xi32>
    %63 = arith.select %60, %59, %54 : vector<8x128xi1>, vector<8x128xf32>
    %64 = vector.extract_strided_slice %9 {offsets = [6, 0], sizes = [1, 128], strides = [1, 1]} : vector<8x128xf32> to vector<1x128xf32>
    %65 = vector.extract_strided_slice %8 {offsets = [6, 0, 0], sizes = [1, 8, 128], strides = [1, 1, 1]} : vector<8x8x128xf32> to vector<1x8x128xf32>
    %66 = vector.shape_cast %65 : vector<1x8x128xf32> to vector<8x128xf32>
    %67 = vector.broadcast %64 : vector<1x128xf32> to vector<8x128xf32>
    %68 = arith.addf %67, %66 : vector<8x128xf32>
    %69 = arith.cmpf ogt, %68, %63 : vector<8x128xf32>
    %c6_i32 = arith.constant 6 : i32
    %70 = vector.broadcast %c6_i32 : i32 to vector<8x128xi32>
    %71 = arith.select %69, %70, %62 : vector<8x128xi1>, vector<8x128xi32>
    %72 = arith.select %69, %68, %63 : vector<8x128xi1>, vector<8x128xf32>
    %c128_i32 = arith.constant 128 : i32
    %73 = arith.muli %12, %c128_i32 : i32
    %74 = tpu.assume_multiple %73, 128 : i32
    %c0_17 = arith.constant 0 : index
    %75 = arith.index_cast %74 : i32 to index
    %76 = vector.load %arg10[%c0_17, %75] : memref<8x1024xf32, #tpu.memory_space<vmem>>, vector<8x128xf32>
    %77 = arith.addf %72, %76 : vector<8x128xf32>
    %c0_18 = arith.constant 0 : index
    %78 = arith.index_cast %12 : i32 to index
    %c0_19 = arith.constant 0 : index
    %79 = vector.load %arg6[%c0_18, %78, %c0_19] : memref<1x8x128xi32, #tpu.memory_space<vmem>>, vector<1x1x128xi32>
    %80 = vector.shape_cast %79 : vector<1x1x128xi32> to vector<1x128xi32>
    %c0_i32_20 = arith.constant 0 : i32
    %81 = vector.broadcast %c0_i32_20 : i32 to vector<1x128xi32>
    %82 = arith.cmpi ne, %80, %81 : vector<1x128xi32>
    %83 = vector.shape_cast %82 : vector<1x128xi1> to vector<1x128xi1>
    %84 = vector.broadcast %83 : vector<1x128xi1> to vector<8x128xi1>
    %85 = arith.select %84, %77, %9 : vector<8x128xi1>, vector<8x128xf32>
    %c0_i32_21 = arith.constant 0 : i32
    %86 = vector.broadcast %c0_i32_21 : i32 to vector<8x128xi32>
    %87 = arith.shli %71, %86 : vector<8x128xi32>
    %88 = arith.ori %11, %87 : vector<8x128xi32>
    %c1_i32_22 = arith.constant 1 : i32
    %89 = arith.addi %10, %c1_i32_22 : i32
    %90 = vector.extract_strided_slice %85 {offsets = [0, 0], sizes = [1, 128], strides = [1, 1]} : vector<8x128xf32> to vector<1x128xf32>
    %91 = vector.extract_strided_slice %8 {offsets = [0, 0, 0], sizes = [1, 8, 128], strides = [1, 1, 1]} : vector<8x8x128xf32> to vector<1x8x128xf32>
    %92 = vector.shape_cast %91 : vector<1x8x128xf32> to vector<8x128xf32>
    %93 = vector.broadcast %90 : vector<1x128xf32> to vector<8x128xf32>
    %94 = arith.addf %93, %92 : vector<8x128xf32>
    %c0_i32_23 = arith.constant 0 : i32
    %95 = vector.broadcast %c0_i32_23 : i32 to vector<8x128xi32>
    %96 = vector.extract_strided_slice %85 {offsets = [1, 0], sizes = [1, 128], strides = [1, 1]} : vector<8x128xf32> to vector<1x128xf32>
    %97 = vector.extract_strided_slice %8 {offsets = [1, 0, 0], sizes = [1, 8, 128], strides = [1, 1, 1]} : vector<8x8x128xf32> to vector<1x8x128xf32>
    %98 = vector.shape_cast %97 : vector<1x8x128xf32> to vector<8x128xf32>
    %99 = vector.broadcast %96 : vector<1x128xf32> to vector<8x128xf32>
    %100 = arith.addf %99, %98 : vector<8x128xf32>
    %101 = arith.cmpf ogt, %100, %94 : vector<8x128xf32>
    %c1_i32_24 = arith.constant 1 : i32
    %102 = vector.broadcast %c1_i32_24 : i32 to vector<8x128xi32>
    %103 = arith.select %101, %102, %95 : vector<8x128xi1>, vector<8x128xi32>
    %104 = arith.select %101, %100, %94 : vector<8x128xi1>, vector<8x128xf32>
    %105 = vector.extract_strided_slice %85 {offsets = [2, 0], sizes = [1, 128], strides = [1, 1]} : vector<8x128xf32> to vector<1x128xf32>
    %106 = vector.extract_strided_slice %8 {offsets = [2, 0, 0], sizes = [1, 8, 128], strides = [1, 1, 1]} : vector<8x8x128xf32> to vector<1x8x128xf32>
    %107 = vector.shape_cast %106 : vector<1x8x128xf32> to vector<8x128xf32>
    %108 = vector.broadcast %105 : vector<1x128xf32> to vector<8x128xf32>
    %109 = arith.addf %108, %107 : vector<8x128xf32>
    %110 = arith.cmpf ogt, %109, %104 : vector<8x128xf32>
    %c2_i32_25 = arith.constant 2 : i32
    %111 = vector.broadcast %c2_i32_25 : i32 to vector<8x128xi32>
    %112 = arith.select %110, %111, %103 : vector<8x128xi1>, vector<8x128xi32>
    %113 = arith.select %110, %109, %104 : vector<8x128xi1>, vector<8x128xf32>
    %114 = vector.extract_strided_slice %85 {offsets = [3, 0], sizes = [1, 128], strides = [1, 1]} : vector<8x128xf32> to vector<1x128xf32>
    %115 = vector.extract_strided_slice %8 {offsets = [3, 0, 0], sizes = [1, 8, 128], strides = [1, 1, 1]} : vector<8x8x128xf32> to vector<1x8x128xf32>
    %116 = vector.shape_cast %115 : vector<1x8x128xf32> to vector<8x128xf32>
    %117 = vector.broadcast %114 : vector<1x128xf32> to vector<8x128xf32>
    %118 = arith.addf %117, %116 : vector<8x128xf32>
    %119 = arith.cmpf ogt, %118, %113 : vector<8x128xf32>
    %c3_i32_26 = arith.constant 3 : i32
    %120 = vector.broadcast %c3_i32_26 : i32 to vector<8x128xi32>
    %121 = arith.select %119, %120, %112 : vector<8x128xi1>, vector<8x128xi32>
    %122 = arith.select %119, %118, %113 : vector<8x128xi1>, vector<8x128xf32>
    %123 = vector.extract_strided_slice %85 {offsets = [4, 0], sizes = [1, 128], strides = [1, 1]} : vector<8x128xf32> to vector<1x128xf32>
    %124 = vector.extract_strided_slice %8 {offsets = [4, 0, 0], sizes = [1, 8, 128], strides = [1, 1, 1]} : vector<8x8x128xf32> to vector<1x8x128xf32>
    %125 = vector.shape_cast %124 : vector<1x8x128xf32> to vector<8x128xf32>
    %126 = vector.broadcast %123 : vector<1x128xf32> to vector<8x128xf32>
    %127 = arith.addf %126, %125 : vector<8x128xf32>
    %128 = arith.cmpf ogt, %127, %122 : vector<8x128xf32>
    %c4_i32_27 = arith.constant 4 : i32
    %129 = vector.broadcast %c4_i32_27 : i32 to vector<8x128xi32>
    %130 = arith.select %128, %129, %121 : vector<8x128xi1>, vector<8x128xi32>
    %131 = arith.select %128, %127, %122 : vector<8x128xi1>, vector<8x128xf32>
    %132 = vector.extract_strided_slice %85 {offsets = [5, 0], sizes = [1, 128], strides = [1, 1]} : vector<8x128xf32> to vector<1x128xf32>
    %133 = vector.extract_strided_slice %8 {offsets = [5, 0, 0], sizes = [1, 8, 128], strides = [1, 1, 1]} : vector<8x8x128xf32> to vector<1x8x128xf32>
    %134 = vector.shape_cast %133 : vector<1x8x128xf32> to vector<8x128xf32>
    %135 = vector.broadcast %132 : vector<1x128xf32> to vector<8x128xf32>
    %136 = arith.addf %135, %134 : vector<8x128xf32>
    %137 = arith.cmpf ogt, %136, %131 : vector<8x128xf32>
    %c5_i32_28 = arith.constant 5 : i32
    %138 = vector.broadcast %c5_i32_28 : i32 to vector<8x128xi32>
    %139 = arith.select %137, %138, %130 : vector<8x128xi1>, vector<8x128xi32>
    %140 = arith.select %137, %136, %131 : vector<8x128xi1>, vector<8x128xf32>
    %141 = vector.extract_strided_slice %85 {offsets = [6, 0], sizes = [1, 128], strides = [1, 1]} : vector<8x128xf32> to vector<1x128xf32>
    %142 = vector.extract_strided_slice %8 {offsets = [6, 0, 0], sizes = [1, 8, 128], strides = [1, 1, 1]} : vector<8x8x128xf32> to vector<1x8x128xf32>
    %143 = vector.shape_cast %142 : vector<1x8x128xf32> to vector<8x128xf32>
    %144 = vector.broadcast %141 : vector<1x128xf32> to vector<8x128xf32>
    %145 = arith.addf %144, %143 : vector<8x128xf32>
    %146 = arith.cmpf ogt, %145, %140 : vector<8x128xf32>
    %c6_i32_29 = arith.constant 6 : i32
    %147 = vector.broadcast %c6_i32_29 : i32 to vector<8x128xi32>
    %148 = arith.select %146, %147, %139 : vector<8x128xi1>, vector<8x128xi32>
    %149 = arith.select %146, %145, %140 : vector<8x128xi1>, vector<8x128xf32>
    %c128_i32_30 = arith.constant 128 : i32
    %150 = arith.muli %89, %c128_i32_30 : i32
    %151 = tpu.assume_multiple %150, 128 : i32
    %c0_31 = arith.constant 0 : index
    %152 = arith.index_cast %151 : i32 to index
    %153 = vector.load %arg10[%c0_31, %152] : memref<8x1024xf32, #tpu.memory_space<vmem>>, vector<8x128xf32>
    %154 = arith.addf %149, %153 : vector<8x128xf32>
    %c0_32 = arith.constant 0 : index
    %155 = arith.index_cast %89 : i32 to index
    %c0_33 = arith.constant 0 : index
    %156 = vector.load %arg6[%c0_32, %155, %c0_33] : memref<1x8x128xi32, #tpu.memory_space<vmem>>, vector<1x1x128xi32>
    %157 = vector.shape_cast %156 : vector<1x1x128xi32> to vector<1x128xi32>
    %c0_i32_34 = arith.constant 0 : i32
    %158 = vector.broadcast %c0_i32_34 : i32 to vector<1x128xi32>
    %159 = arith.cmpi ne, %157, %158 : vector<1x128xi32>
    %160 = vector.shape_cast %159 : vector<1x128xi1> to vector<1x128xi1>
    %161 = vector.broadcast %160 : vector<1x128xi1> to vector<8x128xi1>
    %162 = arith.select %161, %154, %85 : vector<8x128xi1>, vector<8x128xf32>
    %c8_i32 = arith.constant 8 : i32
    %163 = vector.broadcast %c8_i32 : i32 to vector<8x128xi32>
    %164 = arith.shli %148, %163 : vector<8x128xi32>
    %165 = arith.ori %88, %164 : vector<8x128xi32>
    %c2_i32_35 = arith.constant 2 : i32
    %166 = arith.addi %10, %c2_i32_35 : i32
    %167 = vector.extract_strided_slice %162 {offsets = [0, 0], sizes = [1, 128], strides = [1, 1]} : vector<8x128xf32> to vector<1x128xf32>
    %168 = vector.extract_strided_slice %8 {offsets = [0, 0, 0], sizes = [1, 8, 128], strides = [1, 1, 1]} : vector<8x8x128xf32> to vector<1x8x128xf32>
    %169 = vector.shape_cast %168 : vector<1x8x128xf32> to vector<8x128xf32>
    %170 = vector.broadcast %167 : vector<1x128xf32> to vector<8x128xf32>
    %171 = arith.addf %170, %169 : vector<8x128xf32>
    %c0_i32_36 = arith.constant 0 : i32
    %172 = vector.broadcast %c0_i32_36 : i32 to vector<8x128xi32>
    %173 = vector.extract_strided_slice %162 {offsets = [1, 0], sizes = [1, 128], strides = [1, 1]} : vector<8x128xf32> to vector<1x128xf32>
    %174 = vector.extract_strided_slice %8 {offsets = [1, 0, 0], sizes = [1, 8, 128], strides = [1, 1, 1]} : vector<8x8x128xf32> to vector<1x8x128xf32>
    %175 = vector.shape_cast %174 : vector<1x8x128xf32> to vector<8x128xf32>
    %176 = vector.broadcast %173 : vector<1x128xf32> to vector<8x128xf32>
    %177 = arith.addf %176, %175 : vector<8x128xf32>
    %178 = arith.cmpf ogt, %177, %171 : vector<8x128xf32>
    %c1_i32_37 = arith.constant 1 : i32
    %179 = vector.broadcast %c1_i32_37 : i32 to vector<8x128xi32>
    %180 = arith.select %178, %179, %172 : vector<8x128xi1>, vector<8x128xi32>
    %181 = arith.select %178, %177, %171 : vector<8x128xi1>, vector<8x128xf32>
    %182 = vector.extract_strided_slice %162 {offsets = [2, 0], sizes = [1, 128], strides = [1, 1]} : vector<8x128xf32> to vector<1x128xf32>
    %183 = vector.extract_strided_slice %8 {offsets = [2, 0, 0], sizes = [1, 8, 128], strides = [1, 1, 1]} : vector<8x8x128xf32> to vector<1x8x128xf32>
    %184 = vector.shape_cast %183 : vector<1x8x128xf32> to vector<8x128xf32>
    %185 = vector.broadcast %182 : vector<1x128xf32> to vector<8x128xf32>
    %186 = arith.addf %185, %184 : vector<8x128xf32>
    %187 = arith.cmpf ogt, %186, %181 : vector<8x128xf32>
    %c2_i32_38 = arith.constant 2 : i32
    %188 = vector.broadcast %c2_i32_38 : i32 to vector<8x128xi32>
    %189 = arith.select %187, %188, %180 : vector<8x128xi1>, vector<8x128xi32>
    %190 = arith.select %187, %186, %181 : vector<8x128xi1>, vector<8x128xf32>
    %191 = vector.extract_strided_slice %162 {offsets = [3, 0], sizes = [1, 128], strides = [1, 1]} : vector<8x128xf32> to vector<1x128xf32>
    %192 = vector.extract_strided_slice %8 {offsets = [3, 0, 0], sizes = [1, 8, 128], strides = [1, 1, 1]} : vector<8x8x128xf32> to vector<1x8x128xf32>
    %193 = vector.shape_cast %192 : vector<1x8x128xf32> to vector<8x128xf32>
    %194 = vector.broadcast %191 : vector<1x128xf32> to vector<8x128xf32>
    %195 = arith.addf %194, %193 : vector<8x128xf32>
    %196 = arith.cmpf ogt, %195, %190 : vector<8x128xf32>
    %c3_i32_39 = arith.constant 3 : i32
    %197 = vector.broadcast %c3_i32_39 : i32 to vector<8x128xi32>
    %198 = arith.select %196, %197, %189 : vector<8x128xi1>, vector<8x128xi32>
    %199 = arith.select %196, %195, %190 : vector<8x128xi1>, vector<8x128xf32>
    %200 = vector.extract_strided_slice %162 {offsets = [4, 0], sizes = [1, 128], strides = [1, 1]} : vector<8x128xf32> to vector<1x128xf32>
    %201 = vector.extract_strided_slice %8 {offsets = [4, 0, 0], sizes = [1, 8, 128], strides = [1, 1, 1]} : vector<8x8x128xf32> to vector<1x8x128xf32>
    %202 = vector.shape_cast %201 : vector<1x8x128xf32> to vector<8x128xf32>
    %203 = vector.broadcast %200 : vector<1x128xf32> to vector<8x128xf32>
    %204 = arith.addf %203, %202 : vector<8x128xf32>
    %205 = arith.cmpf ogt, %204, %199 : vector<8x128xf32>
    %c4_i32_40 = arith.constant 4 : i32
    %206 = vector.broadcast %c4_i32_40 : i32 to vector<8x128xi32>
    %207 = arith.select %205, %206, %198 : vector<8x128xi1>, vector<8x128xi32>
    %208 = arith.select %205, %204, %199 : vector<8x128xi1>, vector<8x128xf32>
    %209 = vector.extract_strided_slice %162 {offsets = [5, 0], sizes = [1, 128], strides = [1, 1]} : vector<8x128xf32> to vector<1x128xf32>
    %210 = vector.extract_strided_slice %8 {offsets = [5, 0, 0], sizes = [1, 8, 128], strides = [1, 1, 1]} : vector<8x8x128xf32> to vector<1x8x128xf32>
    %211 = vector.shape_cast %210 : vector<1x8x128xf32> to vector<8x128xf32>
    %212 = vector.broadcast %209 : vector<1x128xf32> to vector<8x128xf32>
    %213 = arith.addf %212, %211 : vector<8x128xf32>
    %214 = arith.cmpf ogt, %213, %208 : vector<8x128xf32>
    %c5_i32_41 = arith.constant 5 : i32
    %215 = vector.broadcast %c5_i32_41 : i32 to vector<8x128xi32>
    %216 = arith.select %214, %215, %207 : vector<8x128xi1>, vector<8x128xi32>
    %217 = arith.select %214, %213, %208 : vector<8x128xi1>, vector<8x128xf32>
    %218 = vector.extract_strided_slice %162 {offsets = [6, 0], sizes = [1, 128], strides = [1, 1]} : vector<8x128xf32> to vector<1x128xf32>
    %219 = vector.extract_strided_slice %8 {offsets = [6, 0, 0], sizes = [1, 8, 128], strides = [1, 1, 1]} : vector<8x8x128xf32> to vector<1x8x128xf32>
    %220 = vector.shape_cast %219 : vector<1x8x128xf32> to vector<8x128xf32>
    %221 = vector.broadcast %218 : vector<1x128xf32> to vector<8x128xf32>
    %222 = arith.addf %221, %220 : vector<8x128xf32>
    %223 = arith.cmpf ogt, %222, %217 : vector<8x128xf32>
    %c6_i32_42 = arith.constant 6 : i32
    %224 = vector.broadcast %c6_i32_42 : i32 to vector<8x128xi32>
    %225 = arith.select %223, %224, %216 : vector<8x128xi1>, vector<8x128xi32>
    %226 = arith.select %223, %222, %217 : vector<8x128xi1>, vector<8x128xf32>
    %c128_i32_43 = arith.constant 128 : i32
    %227 = arith.muli %166, %c128_i32_43 : i32
    %228 = tpu.assume_multiple %227, 128 : i32
    %c0_44 = arith.constant 0 : index
    %229 = arith.index_cast %228 : i32 to index
    %230 = vector.load %arg10[%c0_44, %229] : memref<8x1024xf32, #tpu.memory_space<vmem>>, vector<8x128xf32>
    %231 = arith.addf %226, %230 : vector<8x128xf32>
    %c0_45 = arith.constant 0 : index
    %232 = arith.index_cast %166 : i32 to index
    %c0_46 = arith.constant 0 : index
    %233 = vector.load %arg6[%c0_45, %232, %c0_46] : memref<1x8x128xi32, #tpu.memory_space<vmem>>, vector<1x1x128xi32>
    %234 = vector.shape_cast %233 : vector<1x1x128xi32> to vector<1x128xi32>
    %c0_i32_47 = arith.constant 0 : i32
    %235 = vector.broadcast %c0_i32_47 : i32 to vector<1x128xi32>
    %236 = arith.cmpi ne, %234, %235 : vector<1x128xi32>
    %237 = vector.shape_cast %236 : vector<1x128xi1> to vector<1x128xi1>
    %238 = vector.broadcast %237 : vector<1x128xi1> to vector<8x128xi1>
    %239 = arith.select %238, %231, %162 : vector<8x128xi1>, vector<8x128xf32>
    %c16_i32 = arith.constant 16 : i32
    %240 = vector.broadcast %c16_i32 : i32 to vector<8x128xi32>
    %241 = arith.shli %225, %240 : vector<8x128xi32>
    %242 = arith.ori %165, %241 : vector<8x128xi32>
    %c3_i32_48 = arith.constant 3 : i32
    %243 = arith.addi %10, %c3_i32_48 : i32
    %244 = vector.extract_strided_slice %239 {offsets = [0, 0], sizes = [1, 128], strides = [1, 1]} : vector<8x128xf32> to vector<1x128xf32>
    %245 = vector.extract_strided_slice %8 {offsets = [0, 0, 0], sizes = [1, 8, 128], strides = [1, 1, 1]} : vector<8x8x128xf32> to vector<1x8x128xf32>
    %246 = vector.shape_cast %245 : vector<1x8x128xf32> to vector<8x128xf32>
    %247 = vector.broadcast %244 : vector<1x128xf32> to vector<8x128xf32>
    %248 = arith.addf %247, %246 : vector<8x128xf32>
    %c0_i32_49 = arith.constant 0 : i32
    %249 = vector.broadcast %c0_i32_49 : i32 to vector<8x128xi32>
    %250 = vector.extract_strided_slice %239 {offsets = [1, 0], sizes = [1, 128], strides = [1, 1]} : vector<8x128xf32> to vector<1x128xf32>
    %251 = vector.extract_strided_slice %8 {offsets = [1, 0, 0], sizes = [1, 8, 128], strides = [1, 1, 1]} : vector<8x8x128xf32> to vector<1x8x128xf32>
    %252 = vector.shape_cast %251 : vector<1x8x128xf32> to vector<8x128xf32>
    %253 = vector.broadcast %250 : vector<1x128xf32> to vector<8x128xf32>
    %254 = arith.addf %253, %252 : vector<8x128xf32>
    %255 = arith.cmpf ogt, %254, %248 : vector<8x128xf32>
    %c1_i32_50 = arith.constant 1 : i32
    %256 = vector.broadcast %c1_i32_50 : i32 to vector<8x128xi32>
    %257 = arith.select %255, %256, %249 : vector<8x128xi1>, vector<8x128xi32>
    %258 = arith.select %255, %254, %248 : vector<8x128xi1>, vector<8x128xf32>
    %259 = vector.extract_strided_slice %239 {offsets = [2, 0], sizes = [1, 128], strides = [1, 1]} : vector<8x128xf32> to vector<1x128xf32>
    %260 = vector.extract_strided_slice %8 {offsets = [2, 0, 0], sizes = [1, 8, 128], strides = [1, 1, 1]} : vector<8x8x128xf32> to vector<1x8x128xf32>
    %261 = vector.shape_cast %260 : vector<1x8x128xf32> to vector<8x128xf32>
    %262 = vector.broadcast %259 : vector<1x128xf32> to vector<8x128xf32>
    %263 = arith.addf %262, %261 : vector<8x128xf32>
    %264 = arith.cmpf ogt, %263, %258 : vector<8x128xf32>
    %c2_i32_51 = arith.constant 2 : i32
    %265 = vector.broadcast %c2_i32_51 : i32 to vector<8x128xi32>
    %266 = arith.select %264, %265, %257 : vector<8x128xi1>, vector<8x128xi32>
    %267 = arith.select %264, %263, %258 : vector<8x128xi1>, vector<8x128xf32>
    %268 = vector.extract_strided_slice %239 {offsets = [3, 0], sizes = [1, 128], strides = [1, 1]} : vector<8x128xf32> to vector<1x128xf32>
    %269 = vector.extract_strided_slice %8 {offsets = [3, 0, 0], sizes = [1, 8, 128], strides = [1, 1, 1]} : vector<8x8x128xf32> to vector<1x8x128xf32>
    %270 = vector.shape_cast %269 : vector<1x8x128xf32> to vector<8x128xf32>
    %271 = vector.broadcast %268 : vector<1x128xf32> to vector<8x128xf32>
    %272 = arith.addf %271, %270 : vector<8x128xf32>
    %273 = arith.cmpf ogt, %272, %267 : vector<8x128xf32>
    %c3_i32_52 = arith.constant 3 : i32
    %274 = vector.broadcast %c3_i32_52 : i32 to vector<8x128xi32>
    %275 = arith.select %273, %274, %266 : vector<8x128xi1>, vector<8x128xi32>
    %276 = arith.select %273, %272, %267 : vector<8x128xi1>, vector<8x128xf32>
    %277 = vector.extract_strided_slice %239 {offsets = [4, 0], sizes = [1, 128], strides = [1, 1]} : vector<8x128xf32> to vector<1x128xf32>
    %278 = vector.extract_strided_slice %8 {offsets = [4, 0, 0], sizes = [1, 8, 128], strides = [1, 1, 1]} : vector<8x8x128xf32> to vector<1x8x128xf32>
    %279 = vector.shape_cast %278 : vector<1x8x128xf32> to vector<8x128xf32>
    %280 = vector.broadcast %277 : vector<1x128xf32> to vector<8x128xf32>
    %281 = arith.addf %280, %279 : vector<8x128xf32>
    %282 = arith.cmpf ogt, %281, %276 : vector<8x128xf32>
    %c4_i32_53 = arith.constant 4 : i32
    %283 = vector.broadcast %c4_i32_53 : i32 to vector<8x128xi32>
    %284 = arith.select %282, %283, %275 : vector<8x128xi1>, vector<8x128xi32>
    %285 = arith.select %282, %281, %276 : vector<8x128xi1>, vector<8x128xf32>
    %286 = vector.extract_strided_slice %239 {offsets = [5, 0], sizes = [1, 128], strides = [1, 1]} : vector<8x128xf32> to vector<1x128xf32>
    %287 = vector.extract_strided_slice %8 {offsets = [5, 0, 0], sizes = [1, 8, 128], strides = [1, 1, 1]} : vector<8x8x128xf32> to vector<1x8x128xf32>
    %288 = vector.shape_cast %287 : vector<1x8x128xf32> to vector<8x128xf32>
    %289 = vector.broadcast %286 : vector<1x128xf32> to vector<8x128xf32>
    %290 = arith.addf %289, %288 : vector<8x128xf32>
    %291 = arith.cmpf ogt, %290, %285 : vector<8x128xf32>
    %c5_i32_54 = arith.constant 5 : i32
    %292 = vector.broadcast %c5_i32_54 : i32 to vector<8x128xi32>
    %293 = arith.select %291, %292, %284 : vector<8x128xi1>, vector<8x128xi32>
    %294 = arith.select %291, %290, %285 : vector<8x128xi1>, vector<8x128xf32>
    %295 = vector.extract_strided_slice %239 {offsets = [6, 0], sizes = [1, 128], strides = [1, 1]} : vector<8x128xf32> to vector<1x128xf32>
    %296 = vector.extract_strided_slice %8 {offsets = [6, 0, 0], sizes = [1, 8, 128], strides = [1, 1, 1]} : vector<8x8x128xf32> to vector<1x8x128xf32>
    %297 = vector.shape_cast %296 : vector<1x8x128xf32> to vector<8x128xf32>
    %298 = vector.broadcast %295 : vector<1x128xf32> to vector<8x128xf32>
    %299 = arith.addf %298, %297 : vector<8x128xf32>
    %300 = arith.cmpf ogt, %299, %294 : vector<8x128xf32>
    %c6_i32_55 = arith.constant 6 : i32
    %301 = vector.broadcast %c6_i32_55 : i32 to vector<8x128xi32>
    %302 = arith.select %300, %301, %293 : vector<8x128xi1>, vector<8x128xi32>
    %303 = arith.select %300, %299, %294 : vector<8x128xi1>, vector<8x128xf32>
    %c128_i32_56 = arith.constant 128 : i32
    %304 = arith.muli %243, %c128_i32_56 : i32
    %305 = tpu.assume_multiple %304, 128 : i32
    %c0_57 = arith.constant 0 : index
    %306 = arith.index_cast %305 : i32 to index
    %307 = vector.load %arg10[%c0_57, %306] : memref<8x1024xf32, #tpu.memory_space<vmem>>, vector<8x128xf32>
    %308 = arith.addf %303, %307 : vector<8x128xf32>
    %c0_58 = arith.constant 0 : index
    %309 = arith.index_cast %243 : i32 to index
    %c0_59 = arith.constant 0 : index
    %310 = vector.load %arg6[%c0_58, %309, %c0_59] : memref<1x8x128xi32, #tpu.memory_space<vmem>>, vector<1x1x128xi32>
    %311 = vector.shape_cast %310 : vector<1x1x128xi32> to vector<1x128xi32>
    %c0_i32_60 = arith.constant 0 : i32
    %312 = vector.broadcast %c0_i32_60 : i32 to vector<1x128xi32>
    %313 = arith.cmpi ne, %311, %312 : vector<1x128xi32>
    %314 = vector.shape_cast %313 : vector<1x128xi1> to vector<1x128xi1>
    %315 = vector.broadcast %314 : vector<1x128xi1> to vector<8x128xi1>
    %316 = arith.select %315, %308, %239 : vector<8x128xi1>, vector<8x128xf32>
    %c24_i32 = arith.constant 24 : i32
    %317 = vector.broadcast %c24_i32 : i32 to vector<8x128xi32>
    %318 = arith.shli %302, %317 : vector<8x128xi32>
    %319 = arith.ori %242, %318 : vector<8x128xi32>
    %320 = vector.shape_cast %319 : vector<8x128xi32> to vector<1x8x128xi32>
    %c0_61 = arith.constant 0 : index
    %321 = arith.index_cast %c0_i32_12 : i32 to index
    %c0_62 = arith.constant 0 : index
    %c0_63 = arith.constant 0 : index
    %322 = vector.load %arg7[%c0_61, %321, %c0_62, %c0_63] : memref<1x2x8x128xi32, #tpu.memory_space<vmem>>, vector<1x1x8x128xi32>
    %323 = vector.shape_cast %322 : vector<1x1x8x128xi32> to vector<1x8x128xi32>
    %324 = vector.shape_cast %320 : vector<1x8x128xi32> to vector<1x1x8x128xi32>
    tpu.vector_store %arg7[%c0_61, %321, %c0_62, %c0_63], %324 {strides = array<i32>} : memref<1x2x8x128xi32, #tpu.memory_space<vmem>>, vector<1x1x8x128xi32>,
    %c1_i32_64 = arith.constant 1 : i32
    %c4_i32_65 = arith.constant 4 : i32
    %325 = arith.muli %c1_i32_64, %c4_i32_65 : i32
    %c0_i32_66 = arith.constant 0 : i32
    %326 = vector.broadcast %c0_i32_66 : i32 to vector<8x128xi32>
    %c0_i32_67 = arith.constant 0 : i32
    %327 = arith.addi %325, %c0_i32_67 : i32
    %328 = vector.extract_strided_slice %316 {offsets = [0, 0], sizes = [1, 128], strides = [1, 1]} : vector<8x128xf32> to vector<1x128xf32>
    %329 = vector.extract_strided_slice %8 {offsets = [0, 0, 0], sizes = [1, 8, 128], strides = [1, 1, 1]} : vector<8x8x128xf32> to vector<1x8x128xf32>
    %330 = vector.shape_cast %329 : vector<1x8x128xf32> to vector<8x128xf32>
    %331 = vector.broadcast %328 : vector<1x128xf32> to vector<8x128xf32>
    %332 = arith.addf %331, %330 : vector<8x128xf32>
    %c0_i32_68 = arith.constant 0 : i32
    %333 = vector.broadcast %c0_i32_68 : i32 to vector<8x128xi32>
    %334 = vector.extract_strided_slice %316 {offsets = [1, 0], sizes = [1, 128], strides = [1, 1]} : vector<8x128xf32> to vector<1x128xf32>
    %335 = vector.extract_strided_slice %8 {offsets = [1, 0, 0], sizes = [1, 8, 128], strides = [1, 1, 1]} : vector<8x8x128xf32> to vector<1x8x128xf32>
    %336 = vector.shape_cast %335 : vector<1x8x128xf32> to vector<8x128xf32>
    %337 = vector.broadcast %334 : vector<1x128xf32> to vector<8x128xf32>
    %338 = arith.addf %337, %336 : vector<8x128xf32>
    %339 = arith.cmpf ogt, %338, %332 : vector<8x128xf32>
    %c1_i32_69 = arith.constant 1 : i32
    %340 = vector.broadcast %c1_i32_69 : i32 to vector<8x128xi32>
    %341 = arith.select %339, %340, %333 : vector<8x128xi1>, vector<8x128xi32>
    %342 = arith.select %339, %338, %332 : vector<8x128xi1>, vector<8x128xf32>
    %343 = vector.extract_strided_slice %316 {offsets = [2, 0], sizes = [1, 128], strides = [1, 1]} : vector<8x128xf32> to vector<1x128xf32>
    %344 = vector.extract_strided_slice %8 {offsets = [2, 0, 0], sizes = [1, 8, 128], strides = [1, 1, 1]} : vector<8x8x128xf32> to vector<1x8x128xf32>
    %345 = vector.shape_cast %344 : vector<1x8x128xf32> to vector<8x128xf32>
    %346 = vector.broadcast %343 : vector<1x128xf32> to vector<8x128xf32>
    %347 = arith.addf %346, %345 : vector<8x128xf32>
    %348 = arith.cmpf ogt, %347, %342 : vector<8x128xf32>
    %c2_i32_70 = arith.constant 2 : i32
    %349 = vector.broadcast %c2_i32_70 : i32 to vector<8x128xi32>
    %350 = arith.select %348, %349, %341 : vector<8x128xi1>, vector<8x128xi32>
    %351 = arith.select %348, %347, %342 : vector<8x128xi1>, vector<8x128xf32>
    %352 = vector.extract_strided_slice %316 {offsets = [3, 0], sizes = [1, 128], strides = [1, 1]} : vector<8x128xf32> to vector<1x128xf32>
    %353 = vector.extract_strided_slice %8 {offsets = [3, 0, 0], sizes = [1, 8, 128], strides = [1, 1, 1]} : vector<8x8x128xf32> to vector<1x8x128xf32>
    %354 = vector.shape_cast %353 : vector<1x8x128xf32> to vector<8x128xf32>
    %355 = vector.broadcast %352 : vector<1x128xf32> to vector<8x128xf32>
    %356 = arith.addf %355, %354 : vector<8x128xf32>
    %357 = arith.cmpf ogt, %356, %351 : vector<8x128xf32>
    %c3_i32_71 = arith.constant 3 : i32
    %358 = vector.broadcast %c3_i32_71 : i32 to vector<8x128xi32>
    %359 = arith.select %357, %358, %350 : vector<8x128xi1>, vector<8x128xi32>
    %360 = arith.select %357, %356, %351 : vector<8x128xi1>, vector<8x128xf32>
    %361 = vector.extract_strided_slice %316 {offsets = [4, 0], sizes = [1, 128], strides = [1, 1]} : vector<8x128xf32> to vector<1x128xf32>
    %362 = vector.extract_strided_slice %8 {offsets = [4, 0, 0], sizes = [1, 8, 128], strides = [1, 1, 1]} : vector<8x8x128xf32> to vector<1x8x128xf32>
    %363 = vector.shape_cast %362 : vector<1x8x128xf32> to vector<8x128xf32>
    %364 = vector.broadcast %361 : vector<1x128xf32> to vector<8x128xf32>
    %365 = arith.addf %364, %363 : vector<8x128xf32>
    %366 = arith.cmpf ogt, %365, %360 : vector<8x128xf32>
    %c4_i32_72 = arith.constant 4 : i32
    %367 = vector.broadcast %c4_i32_72 : i32 to vector<8x128xi32>
    %368 = arith.select %366, %367, %359 : vector<8x128xi1>, vector<8x128xi32>
    %369 = arith.select %366, %365, %360 : vector<8x128xi1>, vector<8x128xf32>
    %370 = vector.extract_strided_slice %316 {offsets = [5, 0], sizes = [1, 128], strides = [1, 1]} : vector<8x128xf32> to vector<1x128xf32>
    %371 = vector.extract_strided_slice %8 {offsets = [5, 0, 0], sizes = [1, 8, 128], strides = [1, 1, 1]} : vector<8x8x128xf32> to vector<1x8x128xf32>
    %372 = vector.shape_cast %371 : vector<1x8x128xf32> to vector<8x128xf32>
    %373 = vector.broadcast %370 : vector<1x128xf32> to vector<8x128xf32>
    %374 = arith.addf %373, %372 : vector<8x128xf32>
    %375 = arith.cmpf ogt, %374, %369 : vector<8x128xf32>
    %c5_i32_73 = arith.constant 5 : i32
    %376 = vector.broadcast %c5_i32_73 : i32 to vector<8x128xi32>
    %377 = arith.select %375, %376, %368 : vector<8x128xi1>, vector<8x128xi32>
    %378 = arith.select %375, %374, %369 : vector<8x128xi1>, vector<8x128xf32>
    %379 = vector.extract_strided_slice %316 {offsets = [6, 0], sizes = [1, 128], strides = [1, 1]} : vector<8x128xf32> to vector<1x128xf32>
    %380 = vector.extract_strided_slice %8 {offsets = [6, 0, 0], sizes = [1, 8, 128], strides = [1, 1, 1]} : vector<8x8x128xf32> to vector<1x8x128xf32>
    %381 = vector.shape_cast %380 : vector<1x8x128xf32> to vector<8x128xf32>
    %382 = vector.broadcast %379 : vector<1x128xf32> to vector<8x128xf32>
    %383 = arith.addf %382, %381 : vector<8x128xf32>
    %384 = arith.cmpf ogt, %383, %378 : vector<8x128xf32>
    %c6_i32_74 = arith.constant 6 : i32
    %385 = vector.broadcast %c6_i32_74 : i32 to vector<8x128xi32>
    %386 = arith.select %384, %385, %377 : vector<8x128xi1>, vector<8x128xi32>
    %387 = arith.select %384, %383, %378 : vector<8x128xi1>, vector<8x128xf32>
    %c128_i32_75 = arith.constant 128 : i32
    %388 = arith.muli %327, %c128_i32_75 : i32
    %389 = tpu.assume_multiple %388, 128 : i32
    %c0_76 = arith.constant 0 : index
    %390 = arith.index_cast %389 : i32 to index
    %391 = vector.load %arg10[%c0_76, %390] : memref<8x1024xf32, #tpu.memory_space<vmem>>, vector<8x128xf32>
    %392 = arith.addf %387, %391 : vector<8x128xf32>
    %c0_77 = arith.constant 0 : index
    %393 = arith.index_cast %327 : i32 to index
    %c0_78 = arith.constant 0 : index
    %394 = vector.load %arg6[%c0_77, %393, %c0_78] : memref<1x8x128xi32, #tpu.memory_space<vmem>>, vector<1x1x128xi32>
    %395 = vector.shape_cast %394 : vector<1x1x128xi32> to vector<1x128xi32>
    %c0_i32_79 = arith.constant 0 : i32
    %396 = vector.broadcast %c0_i32_79 : i32 to vector<1x128xi32>
    %397 = arith.cmpi ne, %395, %396 : vector<1x128xi32>
    %398 = vector.shape_cast %397 : vector<1x128xi1> to vector<1x128xi1>
    %399 = vector.broadcast %398 : vector<1x128xi1> to vector<8x128xi1>
    %400 = arith.select %399, %392, %316 : vector<8x128xi1>, vector<8x128xf32>
    %c0_i32_80 = arith.constant 0 : i32
    %401 = vector.broadcast %c0_i32_80 : i32 to vector<8x128xi32>
    %402 = arith.shli %386, %401 : vector<8x128xi32>
    %403 = arith.ori %326, %402 : vector<8x128xi32>
    %c1_i32_81 = arith.constant 1 : i32
    %404 = arith.addi %325, %c1_i32_81 : i32
    %405 = vector.extract_strided_slice %400 {offsets = [0, 0], sizes = [1, 128], strides = [1, 1]} : vector<8x128xf32> to vector<1x128xf32>
    %406 = vector.extract_strided_slice %8 {offsets = [0, 0, 0], sizes = [1, 8, 128], strides = [1, 1, 1]} : vector<8x8x128xf32> to vector<1x8x128xf32>
    %407 = vector.shape_cast %406 : vector<1x8x128xf32> to vector<8x128xf32>
    %408 = vector.broadcast %405 : vector<1x128xf32> to vector<8x128xf32>
    %409 = arith.addf %408, %407 : vector<8x128xf32>
    %c0_i32_82 = arith.constant 0 : i32
    %410 = vector.broadcast %c0_i32_82 : i32 to vector<8x128xi32>
    %411 = vector.extract_strided_slice %400 {offsets = [1, 0], sizes = [1, 128], strides = [1, 1]} : vector<8x128xf32> to vector<1x128xf32>
    %412 = vector.extract_strided_slice %8 {offsets = [1, 0, 0], sizes = [1, 8, 128], strides = [1, 1, 1]} : vector<8x8x128xf32> to vector<1x8x128xf32>
    %413 = vector.shape_cast %412 : vector<1x8x128xf32> to vector<8x128xf32>
    %414 = vector.broadcast %411 : vector<1x128xf32> to vector<8x128xf32>
    %415 = arith.addf %414, %413 : vector<8x128xf32>
    %416 = arith.cmpf ogt, %415, %409 : vector<8x128xf32>
    %c1_i32_83 = arith.constant 1 : i32
    %417 = vector.broadcast %c1_i32_83 : i32 to vector<8x128xi32>
    %418 = arith.select %416, %417, %410 : vector<8x128xi1>, vector<8x128xi32>
    %419 = arith.select %416, %415, %409 : vector<8x128xi1>, vector<8x128xf32>
    %420 = vector.extract_strided_slice %400 {offsets = [2, 0], sizes = [1, 128], strides = [1, 1]} : vector<8x128xf32> to vector<1x128xf32>
    %421 = vector.extract_strided_slice %8 {offsets = [2, 0, 0], sizes = [1, 8, 128], strides = [1, 1, 1]} : vector<8x8x128xf32> to vector<1x8x128xf32>
    %422 = vector.shape_cast %421 : vector<1x8x128xf32> to vector<8x128xf32>
    %423 = vector.broadcast %420 : vector<1x128xf32> to vector<8x128xf32>
    %424 = arith.addf %423, %422 : vector<8x128xf32>
    %425 = arith.cmpf ogt, %424, %419 : vector<8x128xf32>
    %c2_i32_84 = arith.constant 2 : i32
    %426 = vector.broadcast %c2_i32_84 : i32 to vector<8x128xi32>
    %427 = arith.select %425, %426, %418 : vector<8x128xi1>, vector<8x128xi32>
    %428 = arith.select %425, %424, %419 : vector<8x128xi1>, vector<8x128xf32>
    %429 = vector.extract_strided_slice %400 {offsets = [3, 0], sizes = [1, 128], strides = [1, 1]} : vector<8x128xf32> to vector<1x128xf32>
    %430 = vector.extract_strided_slice %8 {offsets = [3, 0, 0], sizes = [1, 8, 128], strides = [1, 1, 1]} : vector<8x8x128xf32> to vector<1x8x128xf32>
    %431 = vector.shape_cast %430 : vector<1x8x128xf32> to vector<8x128xf32>
    %432 = vector.broadcast %429 : vector<1x128xf32> to vector<8x128xf32>
    %433 = arith.addf %432, %431 : vector<8x128xf32>
    %434 = arith.cmpf ogt, %433, %428 : vector<8x128xf32>
    %c3_i32_85 = arith.constant 3 : i32
    %435 = vector.broadcast %c3_i32_85 : i32 to vector<8x128xi32>
    %436 = arith.select %434, %435, %427 : vector<8x128xi1>, vector<8x128xi32>
    %437 = arith.select %434, %433, %428 : vector<8x128xi1>, vector<8x128xf32>
    %438 = vector.extract_strided_slice %400 {offsets = [4, 0], sizes = [1, 128], strides = [1, 1]} : vector<8x128xf32> to vector<1x128xf32>
    %439 = vector.extract_strided_slice %8 {offsets = [4, 0, 0], sizes = [1, 8, 128], strides = [1, 1, 1]} : vector<8x8x128xf32> to vector<1x8x128xf32>
    %440 = vector.shape_cast %439 : vector<1x8x128xf32> to vector<8x128xf32>
    %441 = vector.broadcast %438 : vector<1x128xf32> to vector<8x128xf32>
    %442 = arith.addf %441, %440 : vector<8x128xf32>
    %443 = arith.cmpf ogt, %442, %437 : vector<8x128xf32>
    %c4_i32_86 = arith.constant 4 : i32
    %444 = vector.broadcast %c4_i32_86 : i32 to vector<8x128xi32>
    %445 = arith.select %443, %444, %436 : vector<8x128xi1>, vector<8x128xi32>
    %446 = arith.select %443, %442, %437 : vector<8x128xi1>, vector<8x128xf32>
    %447 = vector.extract_strided_slice %400 {offsets = [5, 0], sizes = [1, 128], strides = [1, 1]} : vector<8x128xf32> to vector<1x128xf32>
    %448 = vector.extract_strided_slice %8 {offsets = [5, 0, 0], sizes = [1, 8, 128], strides = [1, 1, 1]} : vector<8x8x128xf32> to vector<1x8x128xf32>
    %449 = vector.shape_cast %448 : vector<1x8x128xf32> to vector<8x128xf32>
    %450 = vector.broadcast %447 : vector<1x128xf32> to vector<8x128xf32>
    %451 = arith.addf %450, %449 : vector<8x128xf32>
    %452 = arith.cmpf ogt, %451, %446 : vector<8x128xf32>
    %c5_i32_87 = arith.constant 5 : i32
    %453 = vector.broadcast %c5_i32_87 : i32 to vector<8x128xi32>
    %454 = arith.select %452, %453, %445 : vector<8x128xi1>, vector<8x128xi32>
    %455 = arith.select %452, %451, %446 : vector<8x128xi1>, vector<8x128xf32>
    %456 = vector.extract_strided_slice %400 {offsets = [6, 0], sizes = [1, 128], strides = [1, 1]} : vector<8x128xf32> to vector<1x128xf32>
    %457 = vector.extract_strided_slice %8 {offsets = [6, 0, 0], sizes = [1, 8, 128], strides = [1, 1, 1]} : vector<8x8x128xf32> to vector<1x8x128xf32>
    %458 = vector.shape_cast %457 : vector<1x8x128xf32> to vector<8x128xf32>
    %459 = vector.broadcast %456 : vector<1x128xf32> to vector<8x128xf32>
    %460 = arith.addf %459, %458 : vector<8x128xf32>
    %461 = arith.cmpf ogt, %460, %455 : vector<8x128xf32>
    %c6_i32_88 = arith.constant 6 : i32
    %462 = vector.broadcast %c6_i32_88 : i32 to vector<8x128xi32>
    %463 = arith.select %461, %462, %454 : vector<8x128xi1>, vector<8x128xi32>
    %464 = arith.select %461, %460, %455 : vector<8x128xi1>, vector<8x128xf32>
    %c128_i32_89 = arith.constant 128 : i32
    %465 = arith.muli %404, %c128_i32_89 : i32
    %466 = tpu.assume_multiple %465, 128 : i32
    %c0_90 = arith.constant 0 : index
    %467 = arith.index_cast %466 : i32 to index
    %468 = vector.load %arg10[%c0_90, %467] : memref<8x1024xf32, #tpu.memory_space<vmem>>, vector<8x128xf32>
    %469 = arith.addf %464, %468 : vector<8x128xf32>
    %c0_91 = arith.constant 0 : index
    %470 = arith.index_cast %404 : i32 to index
    %c0_92 = arith.constant 0 : index
    %471 = vector.load %arg6[%c0_91, %470, %c0_92] : memref<1x8x128xi32, #tpu.memory_space<vmem>>, vector<1x1x128xi32>
    %472 = vector.shape_cast %471 : vector<1x1x128xi32> to vector<1x128xi32>
    %c0_i32_93 = arith.constant 0 : i32
    %473 = vector.broadcast %c0_i32_93 : i32 to vector<1x128xi32>
    %474 = arith.cmpi ne, %472, %473 : vector<1x128xi32>
    %475 = vector.shape_cast %474 : vector<1x128xi1> to vector<1x128xi1>
    %476 = vector.broadcast %475 : vector<1x128xi1> to vector<8x128xi1>
    %477 = arith.select %476, %469, %400 : vector<8x128xi1>, vector<8x128xf32>
    %c8_i32_94 = arith.constant 8 : i32
    %478 = vector.broadcast %c8_i32_94 : i32 to vector<8x128xi32>
    %479 = arith.shli %463, %478 : vector<8x128xi32>
    %480 = arith.ori %403, %479 : vector<8x128xi32>
    %c2_i32_95 = arith.constant 2 : i32
    %481 = arith.addi %325, %c2_i32_95 : i32
    %482 = vector.extract_strided_slice %477 {offsets = [0, 0], sizes = [1, 128], strides = [1, 1]} : vector<8x128xf32> to vector<1x128xf32>
    %483 = vector.extract_strided_slice %8 {offsets = [0, 0, 0], sizes = [1, 8, 128], strides = [1, 1, 1]} : vector<8x8x128xf32> to vector<1x8x128xf32>
    %484 = vector.shape_cast %483 : vector<1x8x128xf32> to vector<8x128xf32>
    %485 = vector.broadcast %482 : vector<1x128xf32> to vector<8x128xf32>
    %486 = arith.addf %485, %484 : vector<8x128xf32>
    %c0_i32_96 = arith.constant 0 : i32
    %487 = vector.broadcast %c0_i32_96 : i32 to vector<8x128xi32>
    %488 = vector.extract_strided_slice %477 {offsets = [1, 0], sizes = [1, 128], strides = [1, 1]} : vector<8x128xf32> to vector<1x128xf32>
    %489 = vector.extract_strided_slice %8 {offsets = [1, 0, 0], sizes = [1, 8, 128], strides = [1, 1, 1]} : vector<8x8x128xf32> to vector<1x8x128xf32>
    %490 = vector.shape_cast %489 : vector<1x8x128xf32> to vector<8x128xf32>
    %491 = vector.broadcast %488 : vector<1x128xf32> to vector<8x128xf32>
    %492 = arith.addf %491, %490 : vector<8x128xf32>
    %493 = arith.cmpf ogt, %492, %486 : vector<8x128xf32>
    %c1_i32_97 = arith.constant 1 : i32
    %494 = vector.broadcast %c1_i32_97 : i32 to vector<8x128xi32>
    %495 = arith.select %493, %494, %487 : vector<8x128xi1>, vector<8x128xi32>
    %496 = arith.select %493, %492, %486 : vector<8x128xi1>, vector<8x128xf32>
    %497 = vector.extract_strided_slice %477 {offsets = [2, 0], sizes = [1, 128], strides = [1, 1]} : vector<8x128xf32> to vector<1x128xf32>
    %498 = vector.extract_strided_slice %8 {offsets = [2, 0, 0], sizes = [1, 8, 128], strides = [1, 1, 1]} : vector<8x8x128xf32> to vector<1x8x128xf32>
    %499 = vector.shape_cast %498 : vector<1x8x128xf32> to vector<8x128xf32>
    %500 = vector.broadcast %497 : vector<1x128xf32> to vector<8x128xf32>
    %501 = arith.addf %500, %499 : vector<8x128xf32>
    %502 = arith.cmpf ogt, %501, %496 : vector<8x128xf32>
    %c2_i32_98 = arith.constant 2 : i32
    %503 = vector.broadcast %c2_i32_98 : i32 to vector<8x128xi32>
    %504 = arith.select %502, %503, %495 : vector<8x128xi1>, vector<8x128xi32>
    %505 = arith.select %502, %501, %496 : vector<8x128xi1>, vector<8x128xf32>
    %506 = vector.extract_strided_slice %477 {offsets = [3, 0], sizes = [1, 128], strides = [1, 1]} : vector<8x128xf32> to vector<1x128xf32>
    %507 = vector.extract_strided_slice %8 {offsets = [3, 0, 0], sizes = [1, 8, 128], strides = [1, 1, 1]} : vector<8x8x128xf32> to vector<1x8x128xf32>
    %508 = vector.shape_cast %507 : vector<1x8x128xf32> to vector<8x128xf32>
    %509 = vector.broadcast %506 : vector<1x128xf32> to vector<8x128xf32>
    %510 = arith.addf %509, %508 : vector<8x128xf32>
    %511 = arith.cmpf ogt, %510, %505 : vector<8x128xf32>
    %c3_i32_99 = arith.constant 3 : i32
    %512 = vector.broadcast %c3_i32_99 : i32 to vector<8x128xi32>
    %513 = arith.select %511, %512, %504 : vector<8x128xi1>, vector<8x128xi32>
    %514 = arith.select %511, %510, %505 : vector<8x128xi1>, vector<8x128xf32>
    %515 = vector.extract_strided_slice %477 {offsets = [4, 0], sizes = [1, 128], strides = [1, 1]} : vector<8x128xf32> to vector<1x128xf32>
    %516 = vector.extract_strided_slice %8 {offsets = [4, 0, 0], sizes = [1, 8, 128], strides = [1, 1, 1]} : vector<8x8x128xf32> to vector<1x8x128xf32>
    %517 = vector.shape_cast %516 : vector<1x8x128xf32> to vector<8x128xf32>
    %518 = vector.broadcast %515 : vector<1x128xf32> to vector<8x128xf32>
    %519 = arith.addf %518, %517 : vector<8x128xf32>
    %520 = arith.cmpf ogt, %519, %514 : vector<8x128xf32>
    %c4_i32_100 = arith.constant 4 : i32
    %521 = vector.broadcast %c4_i32_100 : i32 to vector<8x128xi32>
    %522 = arith.select %520, %521, %513 : vector<8x128xi1>, vector<8x128xi32>
    %523 = arith.select %520, %519, %514 : vector<8x128xi1>, vector<8x128xf32>
    %524 = vector.extract_strided_slice %477 {offsets = [5, 0], sizes = [1, 128], strides = [1, 1]} : vector<8x128xf32> to vector<1x128xf32>
    %525 = vector.extract_strided_slice %8 {offsets = [5, 0, 0], sizes = [1, 8, 128], strides = [1, 1, 1]} : vector<8x8x128xf32> to vector<1x8x128xf32>
    %526 = vector.shape_cast %525 : vector<1x8x128xf32> to vector<8x128xf32>
    %527 = vector.broadcast %524 : vector<1x128xf32> to vector<8x128xf32>
    %528 = arith.addf %527, %526 : vector<8x128xf32>
    %529 = arith.cmpf ogt, %528, %523 : vector<8x128xf32>
    %c5_i32_101 = arith.constant 5 : i32
    %530 = vector.broadcast %c5_i32_101 : i32 to vector<8x128xi32>
    %531 = arith.select %529, %530, %522 : vector<8x128xi1>, vector<8x128xi32>
    %532 = arith.select %529, %528, %523 : vector<8x128xi1>, vector<8x128xf32>
    %533 = vector.extract_strided_slice %477 {offsets = [6, 0], sizes = [1, 128], strides = [1, 1]} : vector<8x128xf32> to vector<1x128xf32>
    %534 = vector.extract_strided_slice %8 {offsets = [6, 0, 0], sizes = [1, 8, 128], strides = [1, 1, 1]} : vector<8x8x128xf32> to vector<1x8x128xf32>
    %535 = vector.shape_cast %534 : vector<1x8x128xf32> to vector<8x128xf32>
    %536 = vector.broadcast %533 : vector<1x128xf32> to vector<8x128xf32>
    %537 = arith.addf %536, %535 : vector<8x128xf32>
    %538 = arith.cmpf ogt, %537, %532 : vector<8x128xf32>
    %c6_i32_102 = arith.constant 6 : i32
    %539 = vector.broadcast %c6_i32_102 : i32 to vector<8x128xi32>
    %540 = arith.select %538, %539, %531 : vector<8x128xi1>, vector<8x128xi32>
    %541 = arith.select %538, %537, %532 : vector<8x128xi1>, vector<8x128xf32>
    %c128_i32_103 = arith.constant 128 : i32
    %542 = arith.muli %481, %c128_i32_103 : i32
    %543 = tpu.assume_multiple %542, 128 : i32
    %c0_104 = arith.constant 0 : index
    %544 = arith.index_cast %543 : i32 to index
    %545 = vector.load %arg10[%c0_104, %544] : memref<8x1024xf32, #tpu.memory_space<vmem>>, vector<8x128xf32>
    %546 = arith.addf %541, %545 : vector<8x128xf32>
    %c0_105 = arith.constant 0 : index
    %547 = arith.index_cast %481 : i32 to index
    %c0_106 = arith.constant 0 : index
    %548 = vector.load %arg6[%c0_105, %547, %c0_106] : memref<1x8x128xi32, #tpu.memory_space<vmem>>, vector<1x1x128xi32>
    %549 = vector.shape_cast %548 : vector<1x1x128xi32> to vector<1x128xi32>
    %c0_i32_107 = arith.constant 0 : i32
    %550 = vector.broadcast %c0_i32_107 : i32 to vector<1x128xi32>
    %551 = arith.cmpi ne, %549, %550 : vector<1x128xi32>
    %552 = vector.shape_cast %551 : vector<1x128xi1> to vector<1x128xi1>
    %553 = vector.broadcast %552 : vector<1x128xi1> to vector<8x128xi1>
    %554 = arith.select %553, %546, %477 : vector<8x128xi1>, vector<8x128xf32>
    %c16_i32_108 = arith.constant 16 : i32
    %555 = vector.broadcast %c16_i32_108 : i32 to vector<8x128xi32>
    %556 = arith.shli %540, %555 : vector<8x128xi32>
    %557 = arith.ori %480, %556 : vector<8x128xi32>
    %c3_i32_109 = arith.constant 3 : i32
    %558 = arith.addi %325, %c3_i32_109 : i32
    %559 = vector.extract_strided_slice %554 {offsets = [0, 0], sizes = [1, 128], strides = [1, 1]} : vector<8x128xf32> to vector<1x128xf32>
    %560 = vector.extract_strided_slice %8 {offsets = [0, 0, 0], sizes = [1, 8, 128], strides = [1, 1, 1]} : vector<8x8x128xf32> to vector<1x8x128xf32>
    %561 = vector.shape_cast %560 : vector<1x8x128xf32> to vector<8x128xf32>
    %562 = vector.broadcast %559 : vector<1x128xf32> to vector<8x128xf32>
    %563 = arith.addf %562, %561 : vector<8x128xf32>
    %c0_i32_110 = arith.constant 0 : i32
    %564 = vector.broadcast %c0_i32_110 : i32 to vector<8x128xi32>
    %565 = vector.extract_strided_slice %554 {offsets = [1, 0], sizes = [1, 128], strides = [1, 1]} : vector<8x128xf32> to vector<1x128xf32>
    %566 = vector.extract_strided_slice %8 {offsets = [1, 0, 0], sizes = [1, 8, 128], strides = [1, 1, 1]} : vector<8x8x128xf32> to vector<1x8x128xf32>
    %567 = vector.shape_cast %566 : vector<1x8x128xf32> to vector<8x128xf32>
    %568 = vector.broadcast %565 : vector<1x128xf32> to vector<8x128xf32>
    %569 = arith.addf %568, %567 : vector<8x128xf32>
    %570 = arith.cmpf ogt, %569, %563 : vector<8x128xf32>
    %c1_i32_111 = arith.constant 1 : i32
    %571 = vector.broadcast %c1_i32_111 : i32 to vector<8x128xi32>
    %572 = arith.select %570, %571, %564 : vector<8x128xi1>, vector<8x128xi32>
    %573 = arith.select %570, %569, %563 : vector<8x128xi1>, vector<8x128xf32>
    %574 = vector.extract_strided_slice %554 {offsets = [2, 0], sizes = [1, 128], strides = [1, 1]} : vector<8x128xf32> to vector<1x128xf32>
    %575 = vector.extract_strided_slice %8 {offsets = [2, 0, 0], sizes = [1, 8, 128], strides = [1, 1, 1]} : vector<8x8x128xf32> to vector<1x8x128xf32>
    %576 = vector.shape_cast %575 : vector<1x8x128xf32> to vector<8x128xf32>
    %577 = vector.broadcast %574 : vector<1x128xf32> to vector<8x128xf32>
    %578 = arith.addf %577, %576 : vector<8x128xf32>
    %579 = arith.cmpf ogt, %578, %573 : vector<8x128xf32>
    %c2_i32_112 = arith.constant 2 : i32
    %580 = vector.broadcast %c2_i32_112 : i32 to vector<8x128xi32>
    %581 = arith.select %579, %580, %572 : vector<8x128xi1>, vector<8x128xi32>
    %582 = arith.select %579, %578, %573 : vector<8x128xi1>, vector<8x128xf32>
    %583 = vector.extract_strided_slice %554 {offsets = [3, 0], sizes = [1, 128], strides = [1, 1]} : vector<8x128xf32> to vector<1x128xf32>
    %584 = vector.extract_strided_slice %8 {offsets = [3, 0, 0], sizes = [1, 8, 128], strides = [1, 1, 1]} : vector<8x8x128xf32> to vector<1x8x128xf32>
    %585 = vector.shape_cast %584 : vector<1x8x128xf32> to vector<8x128xf32>
    %586 = vector.broadcast %583 : vector<1x128xf32> to vector<8x128xf32>
    %587 = arith.addf %586, %585 : vector<8x128xf32>
    %588 = arith.cmpf ogt, %587, %582 : vector<8x128xf32>
    %c3_i32_113 = arith.constant 3 : i32
    %589 = vector.broadcast %c3_i32_113 : i32 to vector<8x128xi32>
    %590 = arith.select %588, %589, %581 : vector<8x128xi1>, vector<8x128xi32>
    %591 = arith.select %588, %587, %582 : vector<8x128xi1>, vector<8x128xf32>
    %592 = vector.extract_strided_slice %554 {offsets = [4, 0], sizes = [1, 128], strides = [1, 1]} : vector<8x128xf32> to vector<1x128xf32>
    %593 = vector.extract_strided_slice %8 {offsets = [4, 0, 0], sizes = [1, 8, 128], strides = [1, 1, 1]} : vector<8x8x128xf32> to vector<1x8x128xf32>
    %594 = vector.shape_cast %593 : vector<1x8x128xf32> to vector<8x128xf32>
    %595 = vector.broadcast %592 : vector<1x128xf32> to vector<8x128xf32>
    %596 = arith.addf %595, %594 : vector<8x128xf32>
    %597 = arith.cmpf ogt, %596, %591 : vector<8x128xf32>
    %c4_i32_114 = arith.constant 4 : i32
    %598 = vector.broadcast %c4_i32_114 : i32 to vector<8x128xi32>
    %599 = arith.select %597, %598, %590 : vector<8x128xi1>, vector<8x128xi32>
    %600 = arith.select %597, %596, %591 : vector<8x128xi1>, vector<8x128xf32>
    %601 = vector.extract_strided_slice %554 {offsets = [5, 0], sizes = [1, 128], strides = [1, 1]} : vector<8x128xf32> to vector<1x128xf32>
    %602 = vector.extract_strided_slice %8 {offsets = [5, 0, 0], sizes = [1, 8, 128], strides = [1, 1, 1]} : vector<8x8x128xf32> to vector<1x8x128xf32>
    %603 = vector.shape_cast %602 : vector<1x8x128xf32> to vector<8x128xf32>
    %604 = vector.broadcast %601 : vector<1x128xf32> to vector<8x128xf32>
    %605 = arith.addf %604, %603 : vector<8x128xf32>
    %606 = arith.cmpf ogt, %605, %600 : vector<8x128xf32>
    %c5_i32_115 = arith.constant 5 : i32
    %607 = vector.broadcast %c5_i32_115 : i32 to vector<8x128xi32>
    %608 = arith.select %606, %607, %599 : vector<8x128xi1>, vector<8x128xi32>
    %609 = arith.select %606, %605, %600 : vector<8x128xi1>, vector<8x128xf32>
    %610 = vector.extract_strided_slice %554 {offsets = [6, 0], sizes = [1, 128], strides = [1, 1]} : vector<8x128xf32> to vector<1x128xf32>
    %611 = vector.extract_strided_slice %8 {offsets = [6, 0, 0], sizes = [1, 8, 128], strides = [1, 1, 1]} : vector<8x8x128xf32> to vector<1x8x128xf32>
    %612 = vector.shape_cast %611 : vector<1x8x128xf32> to vector<8x128xf32>
    %613 = vector.broadcast %610 : vector<1x128xf32> to vector<8x128xf32>
    %614 = arith.addf %613, %612 : vector<8x128xf32>
    %615 = arith.cmpf ogt, %614, %609 : vector<8x128xf32>
    %c6_i32_116 = arith.constant 6 : i32
    %616 = vector.broadcast %c6_i32_116 : i32 to vector<8x128xi32>
    %617 = arith.select %615, %616, %608 : vector<8x128xi1>, vector<8x128xi32>
    %618 = arith.select %615, %614, %609 : vector<8x128xi1>, vector<8x128xf32>
    %c128_i32_117 = arith.constant 128 : i32
    %619 = arith.muli %558, %c128_i32_117 : i32
    %620 = tpu.assume_multiple %619, 128 : i32
    %c0_118 = arith.constant 0 : index
    %621 = arith.index_cast %620 : i32 to index
    %622 = vector.load %arg10[%c0_118, %621] : memref<8x1024xf32, #tpu.memory_space<vmem>>, vector<8x128xf32>
    %623 = arith.addf %618, %622 : vector<8x128xf32>
    %c0_119 = arith.constant 0 : index
    %624 = arith.index_cast %558 : i32 to index
    %c0_120 = arith.constant 0 : index
    %625 = vector.load %arg6[%c0_119, %624, %c0_120] : memref<1x8x128xi32, #tpu.memory_space<vmem>>, vector<1x1x128xi32>
    %626 = vector.shape_cast %625 : vector<1x1x128xi32> to vector<1x128xi32>
    %c0_i32_121 = arith.constant 0 : i32
    %627 = vector.broadcast %c0_i32_121 : i32 to vector<1x128xi32>
    %628 = arith.cmpi ne, %626, %627 : vector<1x128xi32>
    %629 = vector.shape_cast %628 : vector<1x128xi1> to vector<1x128xi1>
    %630 = vector.broadcast %629 : vector<1x128xi1> to vector<8x128xi1>
    %631 = arith.select %630, %623, %554 : vector<8x128xi1>, vector<8x128xf32>
    %c24_i32_122 = arith.constant 24 : i32
    %632 = vector.broadcast %c24_i32_122 : i32 to vector<8x128xi32>
    %633 = arith.shli %617, %632 : vector<8x128xi32>
    %634 = arith.ori %557, %633 : vector<8x128xi32>
    %635 = vector.shape_cast %634 : vector<8x128xi32> to vector<1x8x128xi32>
    %c0_123 = arith.constant 0 : index
    %636 = arith.index_cast %c1_i32_64 : i32 to index
    %c0_124 = arith.constant 0 : index
    %c0_125 = arith.constant 0 : index
    %637 = vector.load %arg7[%c0_123, %636, %c0_124, %c0_125] : memref<1x2x8x128xi32, #tpu.memory_space<vmem>>, vector<1x1x8x128xi32>
    %638 = vector.shape_cast %637 : vector<1x1x8x128xi32> to vector<1x8x128xi32>
    %639 = vector.shape_cast %635 : vector<1x8x128xi32> to vector<1x1x8x128xi32>
    tpu.vector_store %arg7[%c0_123, %636, %c0_124, %c0_125], %639 {strides = array<i32>} : memref<1x2x8x128xi32, #tpu.memory_space<vmem>>, vector<1x1x8x128xi32>,
    %c2_i32_126 = arith.constant 2 : i32
    %c0_127 = arith.constant 0 : index
    %c0_128 = arith.constant 0 : index
    %640 = vector.load %arg9[%c0_127, %c0_128] : memref<8x128xf32, #tpu.memory_space<vmem>>, vector<8x128xf32>
    tpu.vector_store %arg9[%c0_127, %c0_128], %631 {strides = array<i32>} : memref<8x128xf32, #tpu.memory_space<vmem>>, vector<8x128xf32>,
    %c0_i32_129 = arith.constant 0 : i32
    %641 = arith.cmpi eq, %arg1, %c0_i32_129 : i32
    %642 = arith.extui %641 : i1 to i32
    %c0_i32_130 = arith.constant 0 : i32
    %643 = arith.cmpi ne, %642, %c0_i32_130 : i32
    scf.if %643 {
      %c0_131 = arith.constant 0 : index
      %c0_132 = arith.constant 0 : index
      %644 = vector.load %arg5[%c0_131, %c0_132] : memref<8x128xf32, #tpu.memory_space<vmem>>, vector<8x128xf32>
      %645 = arith.addf %631, %644 : vector<8x128xf32>
      %646 = vector.extract_strided_slice %645 {offsets = [0, 0], sizes = [1, 128], strides = [1, 1]} : vector<8x128xf32> to vector<1x128xf32>
      %c0_i32_133 = arith.constant 0 : i32
      %647 = vector.broadcast %c0_i32_133 : i32 to vector<1x128xi32>
      %648 = vector.extract_strided_slice %645 {offsets = [1, 0], sizes = [1, 128], strides = [1, 1]} : vector<8x128xf32> to vector<1x128xf32>
      %649 = arith.cmpf ogt, %648, %646 : vector<1x128xf32>
      %c1_i32_134 = arith.constant 1 : i32
      %650 = vector.broadcast %c1_i32_134 : i32 to vector<1x128xi32>
      %651 = arith.select %649, %650, %647 : vector<1x128xi1>, vector<1x128xi32>
      %652 = arith.select %649, %648, %646 : vector<1x128xi1>, vector<1x128xf32>
      %653 = vector.extract_strided_slice %645 {offsets = [2, 0], sizes = [1, 128], strides = [1, 1]} : vector<8x128xf32> to vector<1x128xf32>
      %654 = arith.cmpf ogt, %653, %652 : vector<1x128xf32>
      %c2_i32_135 = arith.constant 2 : i32
      %655 = vector.broadcast %c2_i32_135 : i32 to vector<1x128xi32>
      %656 = arith.select %654, %655, %651 : vector<1x128xi1>, vector<1x128xi32>
      %657 = arith.select %654, %653, %652 : vector<1x128xi1>, vector<1x128xf32>
      %658 = vector.extract_strided_slice %645 {offsets = [3, 0], sizes = [1, 128], strides = [1, 1]} : vector<8x128xf32> to vector<1x128xf32>
      %659 = arith.cmpf ogt, %658, %657 : vector<1x128xf32>
      %c3_i32_136 = arith.constant 3 : i32
      %660 = vector.broadcast %c3_i32_136 : i32 to vector<1x128xi32>
      %661 = arith.select %659, %660, %656 : vector<1x128xi1>, vector<1x128xi32>
      %662 = arith.select %659, %658, %657 : vector<1x128xi1>, vector<1x128xf32>
      %663 = vector.extract_strided_slice %645 {offsets = [4, 0], sizes = [1, 128], strides = [1, 1]} : vector<8x128xf32> to vector<1x128xf32>
      %664 = arith.cmpf ogt, %663, %662 : vector<1x128xf32>
      %c4_i32_137 = arith.constant 4 : i32
      %665 = vector.broadcast %c4_i32_137 : i32 to vector<1x128xi32>
      %666 = arith.select %664, %665, %661 : vector<1x128xi1>, vector<1x128xi32>
      %667 = arith.select %664, %663, %662 : vector<1x128xi1>, vector<1x128xf32>
      %668 = vector.extract_strided_slice %645 {offsets = [5, 0], sizes = [1, 128], strides = [1, 1]} : vector<8x128xf32> to vector<1x128xf32>
      %669 = arith.cmpf ogt, %668, %667 : vector<1x128xf32>
      %c5_i32_138 = arith.constant 5 : i32
      %670 = vector.broadcast %c5_i32_138 : i32 to vector<1x128xi32>
      %671 = arith.select %669, %670, %666 : vector<1x128xi1>, vector<1x128xi32>
      %672 = arith.select %669, %668, %667 : vector<1x128xi1>, vector<1x128xf32>
      %673 = vector.extract_strided_slice %645 {offsets = [6, 0], sizes = [1, 128], strides = [1, 1]} : vector<8x128xf32> to vector<1x128xf32>
      %674 = arith.cmpf ogt, %673, %672 : vector<1x128xf32>
      %c6_i32_139 = arith.constant 6 : i32
      %675 = vector.broadcast %c6_i32_139 : i32 to vector<1x128xi32>
      %676 = arith.select %674, %675, %671 : vector<1x128xi1>, vector<1x128xi32>
      %c0_140 = arith.constant 0 : index
      %c0_141 = arith.constant 0 : index
      %677 = vector.load %arg8[%c0_140, %c0_141] : memref<1x128xi32, #tpu.memory_space<vmem>>, vector<1x128xi32>
      tpu.vector_store %arg8[%c0_140, %c0_141], %676 {strides = array<i32>} : memref<1x128xi32, #tpu.memory_space<vmem>>, vector<1x128xi32>,
    } else {
    }
    return
  }
  func.func @transform_0(%arg0: i32, %arg1: i32) -> (i32, i32, i32) {
    %c0_i32 = arith.constant 0 : i32
    %c0_i32_0 = arith.constant 0 : i32
    return %arg1, %c0_i32, %arg0 : i32, i32, i32
  }
  func.func @transform_1(%arg0: i32, %arg1: i32) -> (i32, i32) {
    %c0_i32 = arith.constant 0 : i32
    %c0_i32_0 = arith.constant 0 : i32
    %c0_i32_1 = arith.constant 0 : i32
    return %c0_i32, %c0_i32_0 : i32, i32
  }
  func.func @transform_2(%arg0: i32, %arg1: i32) -> (i32, i32, i32) {
    %c0_i32 = arith.constant 0 : i32
    %c0_i32_0 = arith.constant 0 : i32
    %c0_i32_1 = arith.constant 0 : i32
    %c0_i32_2 = arith.constant 0 : i32
    return %c0_i32, %c0_i32_0, %c0_i32_1 : i32, i32, i32
  }
  func.func @transform_3(%arg0: i32, %arg1: i32) -> (i32, i32) {
    %c0_i32 = arith.constant 0 : i32
    %c0_i32_0 = arith.constant 0 : i32
    %c0_i32_1 = arith.constant 0 : i32
    return %c0_i32, %c0_i32_0 : i32, i32
  }
  func.func @transform_4(%arg0: i32, %arg1: i32) -> (i32, i32, i32) {
    %c0_i32 = arith.constant 0 : i32
    %c0_i32_0 = arith.constant 0 : i32
    return %arg1, %c0_i32, %arg0 : i32, i32, i32
  }
  func.func @transform_5(%arg0: i32, %arg1: i32) -> (i32, i32, i32, i32) {
    %c0_i32 = arith.constant 0 : i32
    %c0_i32_0 = arith.constant 0 : i32
    %c0_i32_1 = arith.constant 0 : i32
    return %arg1, %c0_i32, %c0_i32_0, %arg0 : i32, i32, i32, i32
  }
  func.func @transform_6(%arg0: i32, %arg1: i32) -> (i32, i32) {
    %c0_i32 = arith.constant 0 : i32
    %c0_i32_0 = arith.constant 0 : i32
    return %c0_i32, %arg0 : i32, i32
  }
}

</mosaic_0001>

<llo_original>
// kernel: tpu_custom_call.1
$region0: #{tpu_custom_call.1}
  #allocation0 [shape = 'u32[]', space=smem, size = 0x4, offset = 0x4, fixed_abs, tag = 'smem constant byte address 0x4 - core index']
  #allocation1 [shape = 'u32[144,128]{1,0:T(1,128)}', space=vmem, size = 0x12000, scoped, tag = 'internal scratch']
  #allocation2 [shape = 'f32[8,128]{1,0:T(8,128)}', space=vmem, size = 0x1000, scoped, tag = 'scratch operand']
  #allocation3 [shape = 'f32[8,1024]{1,0:T(8,128)}', space=vmem, size = 0x8000, scoped, tag = 'scratch operand']
  %s0 = inlined_call_operand.hbm [shape: bf16[1,32,1024], index: 0, kind: input, shape index: {}]
  %s1 = inlined_call_operand.hbm [shape: bf16[8,32], index: 1, kind: input, shape index: {}]
  %s2 = inlined_call_operand.hbm [shape: f32[8,8,128], index: 2, kind: input, shape index: {}]
  %s3 = inlined_call_operand.vmem [shape: f32[8,128], index: 3, kind: input, shape index: {}]
  %s4 = inlined_call_operand.hbm [shape: s32[1,8,128], index: 4, kind: input, shape index: {}]
  %s5 = inlined_call_operand.hbm [shape: s32[1,2,8,128], index: 5, kind: output, shape index: {0}]
  %s6 = inlined_call_operand.hbm [shape: s32[1,128], index: 6, kind: output, shape index: {1}]
  %7 = xla_tuple %s5, %s6
  %s8 = sld [smem:[#allocation0]]
  $region62: #{tpu_custom_call.1} parent=0
    _
  %s10 = ssub.s32 1, %s8
  %s11 = scalar_select 0, %s10, %s8
  $region1: #{tpu_custom_call.1} parent=0
    #allocation4 [shape = 'u8[65536]{0}', space=vmem, size = 0x10000, scoped, tag = 'input window, operand 0, single buffered']
    #allocation5 [shape = 's32[1]{0}', space=sflag, size = 0x4, scoped, tag = 'scoped memory for tpu_custom_call.1']
    #allocation6 [shape = 's32[1]{0}', space=sflag, size = 0x4, scoped, tag = 'scoped memory for tpu_custom_call.1']
    #allocation7 [shape = 'u8[2048]{0}', space=vmem, size = 0x800, scoped, tag = 'input window, operand 1, single buffered']
    #allocation8 [shape = 's32[1]{0}', space=sflag, size = 0x4, scoped, tag = 'scoped memory for tpu_custom_call.1']
    #allocation9 [shape = 'u8[32768]{0}', space=vmem, size = 0x8000, scoped, tag = 'input window, operand 2, single buffered']
    #allocation10 [shape = 'u8[4096]{0}', space=vmem, size = 0x1000, scoped, tag = 'input window, operand 4, single buffered']
    #allocation11 [shape = 's32[1]{0}', space=sflag, size = 0x4, scoped, tag = 'scoped memory for tpu_custom_call.1']
    #allocation12 [shape = 'u8[8192]{0}', space=vmem, size = 0x2000, scoped, tag = 'output window, operand 0, single buffered']
    #allocation13 [shape = 'u8[512]{0}', space=vmem, size = 0x400, scoped, tag = 'output window, operand 1, single buffered']
    #allocation14 [shape = 's32[1]{0}', space=sflag, size = 0x4, scoped, tag = 'scoped memory for tpu_custom_call.1']
    %12 = vsyncpa [#allocation5], 0
    %13 = vsyncpa [#allocation8], 0
    %14 = vsyncpa [#allocation11], 0
    %15 = vsyncpa [#allocation6], 0
    %16 = vsyncpa [#allocation14], 0
    // Predicated region
    $region2: #{tpu_custom_call.1} parent=1 // pred_check
      _
    $region3: #{tpu_custom_call.1} parent=1 // pred_check_branch
      %18 = sbr.rel (0) target = $region5
    $region4: #{tpu_custom_call.1} parent=1 // pred_region
      %s20 = ssub.s32 2048, 2048
      %21 = vsyncadd [#allocation5], %s20
      %s22 = sshll.u32 [#allocation4], 4
      %s23 = int_to_ptr.vmem [resolvable:$true] %s22
      %28 = dma.hbm_to_vmem [thread:$0]  %s0, 2048, %s23, [#allocation5], 512, 512, 32
    $region5: #{tpu_custom_call.1} parent=1 // pred_fallthru
      _
    // Predicated region
    $region6: #{tpu_custom_call.1} parent=1 // pred_check
      _
    $region7: #{tpu_custom_call.1} parent=1 // pred_check_branch
      %30 = sbr.rel (0) target = $region9
    $region8: #{tpu_custom_call.1} parent=1 // pred_region
      %s32 = ssub.s32 64, 64
      %33 = vsyncadd [#allocation8], %s32
      %s35 = sshll.u32 [#allocation7], 4
      %s36 = int_to_ptr.vmem [resolvable:$true] %s35
      %38 = dma.hbm_to_vmem [thread:$0]  %s1, 64, %s36, [#allocation8]
    $region9: #{tpu_custom_call.1} parent=1 // pred_fallthru
      _
    // Predicated region
    $region10: #{tpu_custom_call.1} parent=1 // pred_check
      _
    $region11: #{tpu_custom_call.1} parent=1 // pred_check_branch
      %40 = sbr.rel (0) target = $region13
    $region12: #{tpu_custom_call.1} parent=1 // pred_region
      %s42 = ssub.s32 1024, 1024
      %43 = vsyncadd [#allocation8], %s42
      %s44 = sshll.u32 [#allocation9], 4
      %s45 = int_to_ptr.vmem [resolvable:$true] %s44
      %50 = dma.hbm_to_vmem [thread:$0]  %s2, 1024, %s45, [#allocation8], 128, 128, 8
    $region13: #{tpu_custom_call.1} parent=1 // pred_fallthru
      _
    // Predicated region
    $region14: #{tpu_custom_call.1} parent=1 // pred_check
      _
    $region15: #{tpu_custom_call.1} parent=1 // pred_check_branch
      %52 = sbr.rel (0) target = $region17
    $region16: #{tpu_custom_call.1} parent=1 // pred_region
      _
    $region17: #{tpu_custom_call.1} parent=1 // pred_fallthru
      _
    // Predicated region
    $region18: #{tpu_custom_call.1} parent=1 // pred_check
      _
    $region19: #{tpu_custom_call.1} parent=1 // pred_check_branch
      %54 = sbr.rel (0) target = $region21
    $region20: #{tpu_custom_call.1} parent=1 // pred_region
      %s56 = ssub.s32 128, 128
      %57 = vsyncadd [#allocation11], %s56
      %s59 = sshll.u32 [#allocation10], 4
      %s60 = int_to_ptr.vmem [resolvable:$true] %s59
      %62 = dma.hbm_to_vmem [thread:$0]  %s4, 128, %s60, [#allocation11]
    $region21: #{tpu_custom_call.1} parent=1 // pred_fallthru
      _
    // Predicated region
    $region22: #{tpu_custom_call.1} parent=1 // pred_check
      _
    $region23: #{tpu_custom_call.1} parent=1 // pred_check_branch
      %64 = sbr.rel (0) target = $region25
    $region24: #{tpu_custom_call.1} parent=1 // pred_region
      %65 = dma.done [#allocation5], 2048
    $region25: #{tpu_custom_call.1} parent=1 // pred_fallthru
      _
    // Predicated region
    $region26: #{tpu_custom_call.1} parent=1 // pred_check
      _
    $region27: #{tpu_custom_call.1} parent=1 // pred_check_branch
      %67 = sbr.rel (0) target = $region29
    $region28: #{tpu_custom_call.1} parent=1 // pred_region
      %68 = dma.done [#allocation8], 64
    $region29: #{tpu_custom_call.1} parent=1 // pred_fallthru
      _
    // Predicated region
    $region30: #{tpu_custom_call.1} parent=1 // pred_check
      _
    $region31: #{tpu_custom_call.1} parent=1 // pred_check_branch
      %70 = sbr.rel (0) target = $region33
    $region32: #{tpu_custom_call.1} parent=1 // pred_region
      %71 = dma.done [#allocation8], 1024
    $region33: #{tpu_custom_call.1} parent=1 // pred_fallthru
      _
    // Predicated region
    $region34: #{tpu_custom_call.1} parent=1 // pred_check
      _
    $region35: #{tpu_custom_call.1} parent=1 // pred_check_branch
      %73 = sbr.rel (0) target = $region37
    $region36: #{tpu_custom_call.1} parent=1 // pred_region
      %74 = dma.done [#allocation11], 128
    $region37: #{tpu_custom_call.1} parent=1 // pred_fallthru
      _
    %p76 = scmp.eq.s32.totalorder 0, 0
    // Predicated region
    $region38: #{tpu_custom_call.1} parent=1 // pred_check
      %p77 = pneg %p76
    $region39: #{tpu_custom_call.1} parent=1 // pred_check_branch
      %79 = sbr.rel (%p77) target = $region41
    $region40: #{tpu_custom_call.1} parent=1 // pred_region
      %80 = vst [vmem:[#allocation2] sm:$0xff] 0.0
    $region41: #{tpu_custom_call.1} parent=1 // pred_fallthru
      _
    %v81 = vld [vmem:[#allocation7] sm:$0xf]
    %v82 = vld [vmem:[#allocation4] sm:$0xff]
    %v83 = vld [vmem:[#allocation4 + $0x8] sm:$0xff]
    %v84 = vld [vmem:[#allocation4 + $0x10] sm:$0xff]
    %v85 = vld [vmem:[#allocation4 + $0x18] sm:$0xff]
    %v86 = vld [vmem:[#allocation4 + $0x20] sm:$0xff]
    %v87 = vld [vmem:[#allocation4 + $0x28] sm:$0xff]
    %v88 = vld [vmem:[#allocation4 + $0x30] sm:$0xff]
    %v89 = vld [vmem:[#allocation4 + $0x38] sm:$0xff]
    %v90 = vld [vmem:[#allocation4 + $0x40] sm:$0xff]
    %v91 = vld [vmem:[#allocation4 + $0x48] sm:$0xff]
    %v92 = vld [vmem:[#allocation4 + $0x50] sm:$0xff]
    %v93 = vld [vmem:[#allocation4 + $0x58] sm:$0xff]
    %v94 = vld [vmem:[#allocation4 + $0x60] sm:$0xff]
    %v95 = vld [vmem:[#allocation4 + $0x68] sm:$0xff]
    %v96 = vld [vmem:[#allocation4 + $0x70] sm:$0xff]
    %v97 = vld [vmem:[#allocation4 + $0x78] sm:$0xff]
    %v114 = vunpack.c.l.b16 %v82
    %v115 = vunpack.c.h.b16 %v82
    %v116 = vunpack.c.l.b16 %v83
    %v117 = vunpack.c.h.b16 %v83
    %v118 = vunpack.c.l.b16 %v84
    %v119 = vunpack.c.h.b16 %v84
    %v120 = vunpack.c.l.b16 %v85
    %v121 = vunpack.c.h.b16 %v85
    %v122 = vunpack.c.l.b16 %v86
    %v123 = vunpack.c.h.b16 %v86
    %v124 = vunpack.c.l.b16 %v87
    %v125 = vunpack.c.h.b16 %v87
    %v126 = vunpack.c.l.b16 %v88
    %v127 = vunpack.c.h.b16 %v88
    %v128 = vunpack.c.l.b16 %v89
    %v129 = vunpack.c.h.b16 %v89
    %v130 = vunpack.c.l.b16 %v90
    %v131 = vunpack.c.h.b16 %v90
    %v132 = vunpack.c.l.b16 %v91
    %v133 = vunpack.c.h.b16 %v91
    %v134 = vunpack.c.l.b16 %v92
    %v135 = vunpack.c.h.b16 %v92
    %v136 = vunpack.c.l.b16 %v93
    %v137 = vunpack.c.h.b16 %v93
    %v138 = vunpack.c.l.b16 %v94
    %v139 = vunpack.c.h.b16 %v94
    %v140 = vunpack.c.l.b16 %v95
    %v141 = vunpack.c.h.b16 %v95
    %v142 = vunpack.c.l.b16 %v96
    %v143 = vunpack.c.h.b16 %v96
    %v144 = vunpack.c.l.b16 %v97
    %v145 = vunpack.c.h.b16 %v97
    %v146 = vpack.c.b16 %v122, %v114
    %v147 = vpack.c.b16 %v123, %v115
    %v148 = vpack.c.b16 %v124, %v116
    %v149 = vpack.c.b16 %v125, %v117
    %v150 = vpack.c.b16 %v126, %v118
    %v151 = vpack.c.b16 %v127, %v119
    %v152 = vpack.c.b16 %v128, %v120
    %v153 = vpack.c.b16 %v129, %v121
    %v154 = vpack.c.b16 %v138, %v130
    %v155 = vpack.c.b16 %v139, %v131
    %v156 = vpack.c.b16 %v140, %v132
    %v157 = vpack.c.b16 %v141, %v133
    %v158 = vpack.c.b16 %v142, %v134
    %v159 = vpack.c.b16 %v143, %v135
    %v160 = vpack.c.b16 %v144, %v136
    %v161 = vpack.c.b16 %v145, %v137
    %vm178 = vcmask 261120
    %v180 = vsel %vm178, %v81, 0
    %182 = vmatprep.subr.bf16.mxu0 %v147
    %183 = vmatpush1.bf16.msra.mxu0 %v146
    %184 = vmatprep.subr.bf16.mxu0 %v155
    %185 = vmatpush1.bf16.msra.mxu0 %v154
    %186 = vmatprep.subr.bf16.mxu0 0
    %187 = vmatpush1.bf16.msra.mxu0 0
    %188 = vmatprep.subr.bf16.mxu0 0
    %189 = vmatpush1.bf16.msra.mxu0 0
    %190 = vmatprep.subr.bf16.mxu0 0
    %191 = vmatpush1.bf16.msra.mxu0 0
    %192 = vmatprep.subr.bf16.mxu0 0
    %193 = vmatpush1.bf16.msra.mxu0 0
    %194 = vmatprep.subr.bf16.mxu0 0
    %195 = vmatpush1.bf16.msra.mxu0 0
    %196 = vmatprep.subr.bf16.mxu0 0
    %197 = vmatpush1.bf16.msra.mxu0 0
    %198 = vmatprep.subr.bf16.mxu0 0
    %199 = vmatpush1.bf16.msra.mxu0 0
    %200 = vmatprep.subr.bf16.mxu0 0
    %201 = vmatpush1.bf16.msra.mxu0 0
    %202 = vmatprep.subr.bf16.mxu0 0
    %203 = vmatpush1.bf16.msra.mxu0 0
    %204 = vmatprep.subr.bf16.mxu0 0
    %205 = vmatpush1.bf16.msra.mxu0 0
    %206 = vmatprep.subr.bf16.mxu0 0
    %207 = vmatpush1.bf16.msra.mxu0 0
    %208 = vmatprep.subr.bf16.mxu0 0
    %209 = vmatpush1.bf16.msra.mxu0 0
    %210 = vmatprep.subr.bf16.mxu0 0
    %211 = vmatpush1.bf16.msra.mxu0 0
    %212 = vmatprep.subr.bf16.mxu0 0
    %213 = vmatpush1.bf16.msra.mxu0 0
    %214 = vmatprep.mubr.bf16.mxu0 0
    %215 = vmatmul.mubr.bf16.gmra.mrb[0].mxu0 %v180
    %v216 = vpop.f32.mrb[0].mxu0
    %v217 = vadd.f32 0.0, %v216
    %v218 = vpop.f32.mrb[0].mxu0
    %v219 = vadd.f32 0.0, %v218
    %v220 = vpop.f32.mrb[0].mxu0
    %v221 = vpop.f32.mrb[0].mxu0
    %222 = vdwg.mxu0
    %223 = vmatprep.subr.bf16.mxu0 %v149
    %224 = vmatpush1.bf16.msra.mxu0 %v148
    %225 = vmatprep.subr.bf16.mxu0 %v157
    %226 = vmatpush1.bf16.msra.mxu0 %v156
    %227 = vmatprep.subr.bf16.mxu0 0
    %228 = vmatpush1.bf16.msra.mxu0 0
    %229 = vmatprep.subr.bf16.mxu0 0
    %230 = vmatpush1.bf16.msra.mxu0 0
    %231 = vmatprep.subr.bf16.mxu0 0
    %232 = vmatpush1.bf16.msra.mxu0 0
    %233 = vmatprep.subr.bf16.mxu0 0
    %234 = vmatpush1.bf16.msra.mxu0 0
    %235 = vmatprep.subr.bf16.mxu0 0
    %236 = vmatpush1.bf16.msra.mxu0 0
    %237 = vmatprep.subr.bf16.mxu0 0
    %238 = vmatpush1.bf16.msra.mxu0 0
    %239 = vmatprep.subr.bf16.mxu0 0
    %240 = vmatpush1.bf16.msra.mxu0 0
    %241 = vmatprep.subr.bf16.mxu0 0
    %242 = vmatpush1.bf16.msra.mxu0 0
    %243 = vmatprep.subr.bf16.mxu0 0
    %244 = vmatpush1.bf16.msra.mxu0 0
    %245 = vmatprep.subr.bf16.mxu0 0
    %246 = vmatpush1.bf16.msra.mxu0 0
    %247 = vmatprep.subr.bf16.mxu0 0
    %248 = vmatpush1.bf16.msra.mxu0 0
    %249 = vmatprep.subr.bf16.mxu0 0
    %250 = vmatpush1.bf16.msra.mxu0 0
    %251 = vmatprep.subr.bf16.mxu0 0
    %252 = vmatpush1.bf16.msra.mxu0 0
    %253 = vmatprep.subr.bf16.mxu0 0
    %254 = vmatpush1.bf16.msra.mxu0 0
    %255 = vmatprep.mubr.bf16.mxu0 0
    %256 = vmatmul.mubr.bf16.gmra.mrb[0].mxu0 %v180
    %v257 = vpop.f32.mrb[0].mxu0
    %v258 = vadd.f32 0.0, %v257
    %v259 = vpop.f32.mrb[0].mxu0
    %v260 = vadd.f32 0.0, %v259
    %v261 = vpop.f32.mrb[0].mxu0
    %v262 = vpop.f32.mrb[0].mxu0
    %263 = vdwg.mxu0
    %264 = vmatprep.subr.bf16.mxu0 %v151
    %265 = vmatpush1.bf16.msra.mxu0 %v150
    %266 = vmatprep.subr.bf16.mxu0 %v159
    %267 = vmatpush1.bf16.msra.mxu0 %v158
    %268 = vmatprep.subr.bf16.mxu0 0
    %269 = vmatpush1.bf16.msra.mxu0 0
    %270 = vmatprep.subr.bf16.mxu0 0
    %271 = vmatpush1.bf16.msra.mxu0 0
    %272 = vmatprep.subr.bf16.mxu0 0
    %273 = vmatpush1.bf16.msra.mxu0 0
    %274 = vmatprep.subr.bf16.mxu0 0
    %275 = vmatpush1.bf16.msra.mxu0 0
    %276 = vmatprep.subr.bf16.mxu0 0
    %277 = vmatpush1.bf16.msra.mxu0 0
    %278 = vmatprep.subr.bf16.mxu0 0
    %279 = vmatpush1.bf16.msra.mxu0 0
    %280 = vmatprep.subr.bf16.mxu0 0
    %281 = vmatpush1.bf16.msra.mxu0 0
    %282 = vmatprep.subr.bf16.mxu0 0
    %283 = vmatpush1.bf16.msra.mxu0 0
    %284 = vmatprep.subr.bf16.mxu0 0
    %285 = vmatpush1.bf16.msra.mxu0 0
    %286 = vmatprep.subr.bf16.mxu0 0
    %287 = vmatpush1.bf16.msra.mxu0 0
    %288 = vmatprep.subr.bf16.mxu0 0
    %289 = vmatpush1.bf16.msra.mxu0 0
    %290 = vmatprep.subr.bf16.mxu0 0
    %291 = vmatpush1.bf16.msra.mxu0 0
    %292 = vmatprep.subr.bf16.mxu0 0
    %293 = vmatpush1.bf16.msra.mxu0 0
    %294 = vmatprep.subr.bf16.mxu0 0
    %295 = vmatpush1.bf16.msra.mxu0 0
    %296 = vmatprep.mubr.bf16.mxu0 0
    %297 = vmatmul.mubr.bf16.gmra.mrb[0].mxu0 %v180
    %v298 = vpop.f32.mrb[0].mxu0
    %v299 = vadd.f32 0.0, %v298
    %v300 = vpop.f32.mrb[0].mxu0
    %v301 = vadd.f32 0.0, %v300
    %v302 = vpop.f32.mrb[0].mxu0
    %v303 = vpop.f32.mrb[0].mxu0
    %304 = vdwg.mxu0
    %305 = vmatprep.subr.bf16.mxu0 %v153
    %306 = vmatpush1.bf16.msra.mxu0 %v152
    %307 = vmatprep.subr.bf16.mxu0 %v161
    %308 = vmatpush1.bf16.msra.mxu0 %v160
    %309 = vmatprep.subr.bf16.mxu0 0
    %310 = vmatpush1.bf16.msra.mxu0 0
    %311 = vmatprep.subr.bf16.mxu0 0
    %312 = vmatpush1.bf16.msra.mxu0 0
    %313 = vmatprep.subr.bf16.mxu0 0
    %314 = vmatpush1.bf16.msra.mxu0 0
    %315 = vmatprep.subr.bf16.mxu0 0
    %316 = vmatpush1.bf16.msra.mxu0 0
    %317 = vmatprep.subr.bf16.mxu0 0
    %318 = vmatpush1.bf16.msra.mxu0 0
    %319 = vmatprep.subr.bf16.mxu0 0
    %320 = vmatpush1.bf16.msra.mxu0 0
    %321 = vmatprep.subr.bf16.mxu0 0
    %322 = vmatpush1.bf16.msra.mxu0 0
    %323 = vmatprep.subr.bf16.mxu0 0
    %324 = vmatpush1.bf16.msra.mxu0 0
    %325 = vmatprep.subr.bf16.mxu0 0
    %326 = vmatpush1.bf16.msra.mxu0 0
    %327 = vmatprep.subr.bf16.mxu0 0
    %328 = vmatpush1.bf16.msra.mxu0 0
    %329 = vmatprep.subr.bf16.mxu0 0
    %330 = vmatpush1.bf16.msra.mxu0 0
    %331 = vmatprep.subr.bf16.mxu0 0
    %332 = vmatpush1.bf16.msra.mxu0 0
    %333 = vmatprep.subr.bf16.mxu0 0
    %334 = vmatpush1.bf16.msra.mxu0 0
    %335 = vmatprep.subr.bf16.mxu0 0
    %336 = vmatpush1.bf16.msra.mxu0 0
    %337 = vmatprep.mubr.bf16.mxu0 0
    %338 = vmatmul.mubr.bf16.gmra.mrb[0].mxu0 %v180
    %v339 = vpop.f32.mrb[0].mxu0
    %v340 = vadd.f32 0.0, %v339
    %v341 = vpop.f32.mrb[0].mxu0
    %v342 = vadd.f32 0.0, %v341
    %v343 = vpop.f32.mrb[0].mxu0
    %v344 = vpop.f32.mrb[0].mxu0
    %345 = vdwg.mxu0
    %346 = vst [vmem:[#allocation3] sm:$0xff] %v217
    %347 = vst [vmem:[#allocation3 + $0x8] sm:$0xff] %v219
    %348 = vst [vmem:[#allocation3 + $0x10] sm:$0xff] %v258
    %349 = vst [vmem:[#allocation3 + $0x18] sm:$0xff] %v260
    %350 = vst [vmem:[#allocation3 + $0x20] sm:$0xff] %v299
    %351 = vst [vmem:[#allocation3 + $0x28] sm:$0xff] %v301
    %352 = vst [vmem:[#allocation3 + $0x30] sm:$0xff] %v340
    %353 = vst [vmem:[#allocation3 + $0x38] sm:$0xff] %v342
    %v354 = vld [vmem:[#allocation9] sm:$0xff]
    %v355 = vld [vmem:[#allocation9 + $0x8] sm:$0xff]
    %v356 = vld [vmem:[#allocation9 + $0x10] sm:$0xff]
    %v357 = vld [vmem:[#allocation9 + $0x18] sm:$0xff]
    %v358 = vld [vmem:[#allocation9 + $0x20] sm:$0xff]
    %v359 = vld [vmem:[#allocation9 + $0x28] sm:$0xff]
    %v360 = vld [vmem:[#allocation9 + $0x30] sm:$0xff]
    %v361 = vld [vmem:[#allocation2] sm:$0xff]
    %v362 = vlaneseq
    %v363 = vshrl.u32 %v362, 7
    %v364 = vsub.s32 0, %v363
    %v365 = vrot.slane %v361, %v364
    %v366 = vadd.f32 %v365, %v354
    %v367 = vlaneseq
    %v368 = vshrl.u32 %v367, 7
    %v369 = vsub.s32 1, %v368
    %v370 = vrot.slane %v361, %v369
    %v371 = vadd.f32 %v370, %v355
    %vm372 = vcmp.gt.f32.partialorder %v371, %v366
    %v373 = vsel %vm372, 1, 0
    %v374 = vsel %vm372, %v371, %v366
    %v375 = vlaneseq
    %v376 = vshrl.u32 %v375, 7
    %v377 = vsub.s32 2, %v376
    %v378 = vrot.slane %v361, %v377
    %v379 = vadd.f32 %v378, %v356
    %vm380 = vcmp.gt.f32.partialorder %v379, %v374
    %v381 = vsel %vm380, 2, %v373
    %v382 = vsel %vm380, %v379, %v374
    %v383 = vlaneseq
    %v384 = vshrl.u32 %v383, 7
    %v385 = vsub.s32 3, %v384
    %v386 = vrot.slane %v361, %v385
    %v387 = vadd.f32 %v386, %v357
    %vm388 = vcmp.gt.f32.partialorder %v387, %v382
    %v389 = vsel %vm388, 3, %v381
    %v390 = vsel %vm388, %v387, %v382
    %v391 = vlaneseq
    %v392 = vshrl.u32 %v391, 7
    %v393 = vsub.s32 4, %v392
    %v394 = vrot.slane %v361, %v393
    %v395 = vadd.f32 %v394, %v358
    %vm396 = vcmp.gt.f32.partialorder %v395, %v390
    %v397 = vsel %vm396, 4, %v389
    %v398 = vsel %vm396, %v395, %v390
    %v399 = vlaneseq
    %v400 = vshrl.u32 %v399, 7
    %v401 = vsub.s32 5, %v400
    %v402 = vrot.slane %v361, %v401
    %v403 = vadd.f32 %v402, %v359
    %vm404 = vcmp.gt.f32.partialorder %v403, %v398
    %v405 = vsel %vm404, 5, %v397
    %v406 = vsel %vm404, %v403, %v398
    %v407 = vlaneseq
    %v408 = vshrl.u32 %v407, 7
    %v409 = vsub.s32 6, %v408
    %v410 = vrot.slane %v361, %v409
    %v411 = vadd.f32 %v410, %v360
    %vm412 = vcmp.gt.f32.partialorder %v411, %v406
    %v413 = vsel %vm412, 6, %v405
    %v414 = vsel %vm412, %v411, %v406
    %v415 = vld [vmem:[#allocation3] sm:$0xff]
    %v416 = vadd.f32 %v414, %v415
    %v417 = vld [vmem:[#allocation10] sm:$0x1]
    %vm418 = vcmp.ne.s32.totalorder %v417, 0
    %v419 = vsel %vm418, 1, 0
    %v420 = vlaneseq
    %v421 = vshrl.u32 %v420, 7
    %v422 = vsub.s32 0, %v421
    %v423 = vrot.slane %v419, %v422
    %vm424 = vcmp.eq.s32.totalorder %v423, 1
    %v425 = vsel %vm424, %v416, %v361
    %v426 = vlaneseq
    %v427 = vshrl.u32 %v426, 7
    %v428 = vsub.s32 0, %v427
    %v429 = vrot.slane %v425, %v428
    %v430 = vadd.f32 %v429, %v354
    %v431 = vlaneseq
    %v432 = vshrl.u32 %v431, 7
    %v433 = vsub.s32 1, %v432
    %v434 = vrot.slane %v425, %v433
    %v435 = vadd.f32 %v434, %v355
    %vm436 = vcmp.gt.f32.partialorder %v435, %v430
    %v437 = vsel %vm436, 1, 0
    %v438 = vsel %vm436, %v435, %v430
    %v439 = vlaneseq
    %v440 = vshrl.u32 %v439, 7
    %v441 = vsub.s32 2, %v440
    %v442 = vrot.slane %v425, %v441
    %v443 = vadd.f32 %v442, %v356
    %vm444 = vcmp.gt.f32.partialorder %v443, %v438
    %v445 = vsel %vm444, 2, %v437
    %v446 = vsel %vm444, %v443, %v438
    %v447 = vlaneseq
    %v448 = vshrl.u32 %v447, 7
    %v449 = vsub.s32 3, %v448
    %v450 = vrot.slane %v425, %v449
    %v451 = vadd.f32 %v450, %v357
    %vm452 = vcmp.gt.f32.partialorder %v451, %v446
    %v453 = vsel %vm452, 3, %v445
    %v454 = vsel %vm452, %v451, %v446
    %v455 = vlaneseq
    %v456 = vshrl.u32 %v455, 7
    %v457 = vsub.s32 4, %v456
    %v458 = vrot.slane %v425, %v457
    %v459 = vadd.f32 %v458, %v358
    %vm460 = vcmp.gt.f32.partialorder %v459, %v454
    %v461 = vsel %vm460, 4, %v453
    %v462 = vsel %vm460, %v459, %v454
    %v463 = vlaneseq
    %v464 = vshrl.u32 %v463, 7
    %v465 = vsub.s32 5, %v464
    %v466 = vrot.slane %v425, %v465
    %v467 = vadd.f32 %v466, %v359
    %vm468 = vcmp.gt.f32.partialorder %v467, %v462
    %v469 = vsel %vm468, 5, %v461
    %v470 = vsel %vm468, %v467, %v462
    %v471 = vlaneseq
    %v472 = vshrl.u32 %v471, 7
    %v473 = vsub.s32 6, %v472
    %v474 = vrot.slane %v425, %v473
    %v475 = vadd.f32 %v474, %v360
    %vm476 = vcmp.gt.f32.partialorder %v475, %v470
    %v477 = vsel %vm476, 6, %v469
    %v478 = vsel %vm476, %v475, %v470
    %s479 = scalar_lea.vmem [#allocation3], 8
    %v480 = vld [vmem:[%s479] sm:$0xff]
    %v481 = vadd.f32 %v478, %v480
    %v482 = vld [vmem:[#allocation10 + $0x1] sm:$0x1]
    %vm483 = vcmp.ne.s32.totalorder %v482, 0
    %v484 = vsel %vm483, 1, 0
    %v485 = vlaneseq
    %v486 = vshrl.u32 %v485, 7
    %v487 = vsub.s32 0, %v486
    %v488 = vrot.slane %v484, %v487
    %vm489 = vcmp.eq.s32.totalorder %v488, 1
    %v490 = vsel %vm489, %v481, %v425
    %v491 = vshll.u32 %v477, 8
    %v492 = vor.u32 %v413, %v491
    %v493 = vlaneseq
    %v494 = vshrl.u32 %v493, 7
    %v495 = vsub.s32 0, %v494
    %v496 = vrot.slane %v490, %v495
    %v497 = vadd.f32 %v496, %v354
    %v498 = vlaneseq
    %v499 = vshrl.u32 %v498, 7
    %v500 = vsub.s32 1, %v499
    %v501 = vrot.slane %v490, %v500
    %v502 = vadd.f32 %v501, %v355
    %vm503 = vcmp.gt.f32.partialorder %v502, %v497
    %v504 = vsel %vm503, 1, 0
    %v505 = vsel %vm503, %v502, %v497
    %v506 = vlaneseq
    %v507 = vshrl.u32 %v506, 7
    %v508 = vsub.s32 2, %v507
    %v509 = vrot.slane %v490, %v508
    %v510 = vadd.f32 %v509, %v356
    %vm511 = vcmp.gt.f32.partialorder %v510, %v505
    %v512 = vsel %vm511, 2, %v504
    %v513 = vsel %vm511, %v510, %v505
    %v514 = vlaneseq
    %v515 = vshrl.u32 %v514, 7
    %v516 = vsub.s32 3, %v515
    %v517 = vrot.slane %v490, %v516
    %v518 = vadd.f32 %v517, %v357
    %vm519 = vcmp.gt.f32.partialorder %v518, %v513
    %v520 = vsel %vm519, 3, %v512
    %v521 = vsel %vm519, %v518, %v513
    %v522 = vlaneseq
    %v523 = vshrl.u32 %v522, 7
    %v524 = vsub.s32 4, %v523
    %v525 = vrot.slane %v490, %v524
    %v526 = vadd.f32 %v525, %v358
    %vm527 = vcmp.gt.f32.partialorder %v526, %v521
    %v528 = vsel %vm527, 4, %v520
    %v529 = vsel %vm527, %v526, %v521
    %v530 = vlaneseq
    %v531 = vshrl.u32 %v530, 7
    %v532 = vsub.s32 5, %v531
    %v533 = vrot.slane %v490, %v532
    %v534 = vadd.f32 %v533, %v359
    %vm535 = vcmp.gt.f32.partialorder %v534, %v529
    %v536 = vsel %vm535, 5, %v528
    %v537 = vsel %vm535, %v534, %v529
    %v538 = vlaneseq
    %v539 = vshrl.u32 %v538, 7
    %v540 = vsub.s32 6, %v539
    %v541 = vrot.slane %v490, %v540
    %v542 = vadd.f32 %v541, %v360
    %vm543 = vcmp.gt.f32.partialorder %v542, %v537
    %v544 = vsel %vm543, 6, %v536
    %v545 = vsel %vm543, %v542, %v537
    %s546 = scalar_lea.vmem [#allocation3], 16
    %v547 = vld [vmem:[%s546] sm:$0xff]
    %v548 = vadd.f32 %v545, %v547
    %v549 = vld [vmem:[#allocation10 + $0x2] sm:$0x1]
    %vm550 = vcmp.ne.s32.totalorder %v549, 0
    %v551 = vsel %vm550, 1, 0
    %v552 = vlaneseq
    %v553 = vshrl.u32 %v552, 7
    %v554 = vsub.s32 0, %v553
    %v555 = vrot.slane %v551, %v554
    %vm556 = vcmp.eq.s32.totalorder %v555, 1
    %v557 = vsel %vm556, %v548, %v490
    %v558 = vshll.u32 %v544, 16
    %v559 = vor.u32 %v492, %v558
    %v560 = vlaneseq
    %v561 = vshrl.u32 %v560, 7
    %v562 = vsub.s32 0, %v561
    %v563 = vrot.slane %v557, %v562
    %v564 = vadd.f32 %v563, %v354
    %v565 = vlaneseq
    %v566 = vshrl.u32 %v565, 7
    %v567 = vsub.s32 1, %v566
    %v568 = vrot.slane %v557, %v567
    %v569 = vadd.f32 %v568, %v355
    %vm570 = vcmp.gt.f32.partialorder %v569, %v564
    %v571 = vsel %vm570, 1, 0
    %v572 = vsel %vm570, %v569, %v564
    %v573 = vlaneseq
    %v574 = vshrl.u32 %v573, 7
    %v575 = vsub.s32 2, %v574
    %v576 = vrot.slane %v557, %v575
    %v577 = vadd.f32 %v576, %v356
    %vm578 = vcmp.gt.f32.partialorder %v577, %v572
    %v579 = vsel %vm578, 2, %v571
    %v580 = vsel %vm578, %v577, %v572
    %v581 = vlaneseq
    %v582 = vshrl.u32 %v581, 7
    %v583 = vsub.s32 3, %v582
    %v584 = vrot.slane %v557, %v583
    %v585 = vadd.f32 %v584, %v357
    %vm586 = vcmp.gt.f32.partialorder %v585, %v580
    %v587 = vsel %vm586, 3, %v579
    %v588 = vsel %vm586, %v585, %v580
    %v589 = vlaneseq
    %v590 = vshrl.u32 %v589, 7
    %v591 = vsub.s32 4, %v590
    %v592 = vrot.slane %v557, %v591
    %v593 = vadd.f32 %v592, %v358
    %vm594 = vcmp.gt.f32.partialorder %v593, %v588
    %v595 = vsel %vm594, 4, %v587
    %v596 = vsel %vm594, %v593, %v588
    %v597 = vlaneseq
    %v598 = vshrl.u32 %v597, 7
    %v599 = vsub.s32 5, %v598
    %v600 = vrot.slane %v557, %v599
    %v601 = vadd.f32 %v600, %v359
    %vm602 = vcmp.gt.f32.partialorder %v601, %v596
    %v603 = vsel %vm602, 5, %v595
    %v604 = vsel %vm602, %v601, %v596
    %v605 = vlaneseq
    %v606 = vshrl.u32 %v605, 7
    %v607 = vsub.s32 6, %v606
    %v608 = vrot.slane %v557, %v607
    %v609 = vadd.f32 %v608, %v360
    %vm610 = vcmp.gt.f32.partialorder %v609, %v604
    %v611 = vsel %vm610, 6, %v603
    %v612 = vsel %vm610, %v609, %v604
    %s613 = scalar_lea.vmem [#allocation3], 24
    %v614 = vld [vmem:[%s613] sm:$0xff]
    %v615 = vadd.f32 %v612, %v614
    %v616 = vld [vmem:[#allocation10 + $0x3] sm:$0x1]
    %vm617 = vcmp.ne.s32.totalorder %v616, 0
    %v618 = vsel %vm617, 1, 0
    %v619 = vlaneseq
    %v620 = vshrl.u32 %v619, 7
    %v621 = vsub.s32 0, %v620
    %v622 = vrot.slane %v618, %v621
    %vm623 = vcmp.eq.s32.totalorder %v622, 1
    %v624 = vsel %vm623, %v615, %v557
    %v625 = vshll.u32 %v611, 24
    %v626 = vor.u32 %v559, %v625
    %627 = vst [vmem:[#allocation12] sm:$0xff] %v626
    %v628 = vlaneseq
    %v629 = vshrl.u32 %v628, 7
    %v630 = vsub.s32 0, %v629
    %v631 = vrot.slane %v624, %v630
    %v632 = vadd.f32 %v631, %v354
    %v633 = vlaneseq
    %v634 = vshrl.u32 %v633, 7
    %v635 = vsub.s32 1, %v634
    %v636 = vrot.slane %v624, %v635
    %v637 = vadd.f32 %v636, %v355
    %vm638 = vcmp.gt.f32.partialorder %v637, %v632
    %v639 = vsel %vm638, 1, 0
    %v640 = vsel %vm638, %v637, %v632
    %v641 = vlaneseq
    %v642 = vshrl.u32 %v641, 7
    %v643 = vsub.s32 2, %v642
    %v644 = vrot.slane %v624, %v643
    %v645 = vadd.f32 %v644, %v356
    %vm646 = vcmp.gt.f32.partialorder %v645, %v640
    %v647 = vsel %vm646, 2, %v639
    %v648 = vsel %vm646, %v645, %v640
    %v649 = vlaneseq
    %v650 = vshrl.u32 %v649, 7
    %v651 = vsub.s32 3, %v650
    %v652 = vrot.slane %v624, %v651
    %v653 = vadd.f32 %v652, %v357
    %vm654 = vcmp.gt.f32.partialorder %v653, %v648
    %v655 = vsel %vm654, 3, %v647
    %v656 = vsel %vm654, %v653, %v648
    %v657 = vlaneseq
    %v658 = vshrl.u32 %v657, 7
    %v659 = vsub.s32 4, %v658
    %v660 = vrot.slane %v624, %v659
    %v661 = vadd.f32 %v660, %v358
    %vm662 = vcmp.gt.f32.partialorder %v661, %v656
    %v663 = vsel %vm662, 4, %v655
    %v664 = vsel %vm662, %v661, %v656
    %v665 = vlaneseq
    %v666 = vshrl.u32 %v665, 7
    %v667 = vsub.s32 5, %v666
    %v668 = vrot.slane %v624, %v667
    %v669 = vadd.f32 %v668, %v359
    %vm670 = vcmp.gt.f32.partialorder %v669, %v664
    %v671 = vsel %vm670, 5, %v663
    %v672 = vsel %vm670, %v669, %v664
    %v673 = vlaneseq
    %v674 = vshrl.u32 %v673, 7
    %v675 = vsub.s32 6, %v674
    %v676 = vrot.slane %v624, %v675
    %v677 = vadd.f32 %v676, %v360
    %vm678 = vcmp.gt.f32.partialorder %v677, %v672
    %v679 = vsel %vm678, 6, %v671
    %v680 = vsel %vm678, %v677, %v672
    %s681 = scalar_lea.vmem [#allocation3], 32
    %v682 = vld [vmem:[%s681] sm:$0xff]
    %v683 = vadd.f32 %v680, %v682
    %v684 = vld [vmem:[#allocation10 + $0x4] sm:$0x1]
    %vm685 = vcmp.ne.s32.totalorder %v684, 0
    %v686 = vsel %vm685, 1, 0
    %v687 = vlaneseq
    %v688 = vshrl.u32 %v687, 7
    %v689 = vsub.s32 0, %v688
    %v690 = vrot.slane %v686, %v689
    %vm691 = vcmp.eq.s32.totalorder %v690, 1
    %v692 = vsel %vm691, %v683, %v624
    %v693 = vlaneseq
    %v694 = vshrl.u32 %v693, 7
    %v695 = vsub.s32 0, %v694
    %v696 = vrot.slane %v692, %v695
    %v697 = vadd.f32 %v696, %v354
    %v698 = vlaneseq
    %v699 = vshrl.u32 %v698, 7
    %v700 = vsub.s32 1, %v699
    %v701 = vrot.slane %v692, %v700
    %v702 = vadd.f32 %v701, %v355
    %vm703 = vcmp.gt.f32.partialorder %v702, %v697
    %v704 = vsel %vm703, 1, 0
    %v705 = vsel %vm703, %v702, %v697
    %v706 = vlaneseq
    %v707 = vshrl.u32 %v706, 7
    %v708 = vsub.s32 2, %v707
    %v709 = vrot.slane %v692, %v708
    %v710 = vadd.f32 %v709, %v356
    %vm711 = vcmp.gt.f32.partialorder %v710, %v705
    %v712 = vsel %vm711, 2, %v704
    %v713 = vsel %vm711, %v710, %v705
    %v714 = vlaneseq
    %v715 = vshrl.u32 %v714, 7
    %v716 = vsub.s32 3, %v715
    %v717 = vrot.slane %v692, %v716
    %v718 = vadd.f32 %v717, %v357
    %vm719 = vcmp.gt.f32.partialorder %v718, %v713
    %v720 = vsel %vm719, 3, %v712
    %v721 = vsel %vm719, %v718, %v713
    %v722 = vlaneseq
    %v723 = vshrl.u32 %v722, 7
    %v724 = vsub.s32 4, %v723
    %v725 = vrot.slane %v692, %v724
    %v726 = vadd.f32 %v725, %v358
    %vm727 = vcmp.gt.f32.partialorder %v726, %v721
    %v728 = vsel %vm727, 4, %v720
    %v729 = vsel %vm727, %v726, %v721
    %v730 = vlaneseq
    %v731 = vshrl.u32 %v730, 7
    %v732 = vsub.s32 5, %v731
    %v733 = vrot.slane %v692, %v732
    %v734 = vadd.f32 %v733, %v359
    %vm735 = vcmp.gt.f32.partialorder %v734, %v729
    %v736 = vsel %vm735, 5, %v728
    %v737 = vsel %vm735, %v734, %v729
    %v738 = vlaneseq
    %v739 = vshrl.u32 %v738, 7
    %v740 = vsub.s32 6, %v739
    %v741 = vrot.slane %v692, %v740
    %v742 = vadd.f32 %v741, %v360
    %vm743 = vcmp.gt.f32.partialorder %v742, %v737
    %v744 = vsel %vm743, 6, %v736
    %v745 = vsel %vm743, %v742, %v737
    %s746 = scalar_lea.vmem [#allocation3], 40
    %v747 = vld [vmem:[%s746] sm:$0xff]
    %v748 = vadd.f32 %v745, %v747
    %v749 = vld [vmem:[#allocation10 + $0x5] sm:$0x1]
    %vm750 = vcmp.ne.s32.totalorder %v749, 0
    %v751 = vsel %vm750, 1, 0
    %v752 = vlaneseq
    %v753 = vshrl.u32 %v752, 7
    %v754 = vsub.s32 0, %v753
    %v755 = vrot.slane %v751, %v754
    %vm756 = vcmp.eq.s32.totalorder %v755, 1
    %v757 = vsel %vm756, %v748, %v692
    %v758 = vshll.u32 %v744, 8
    %v759 = vor.u32 %v679, %v758
    %v760 = vlaneseq
    %v761 = vshrl.u32 %v760, 7
    %v762 = vsub.s32 0, %v761
    %v763 = vrot.slane %v757, %v762
    %v764 = vadd.f32 %v763, %v354
    %v765 = vlaneseq
    %v766 = vshrl.u32 %v765, 7
    %v767 = vsub.s32 1, %v766
    %v768 = vrot.slane %v757, %v767
    %v769 = vadd.f32 %v768, %v355
    %vm770 = vcmp.gt.f32.partialorder %v769, %v764
    %v771 = vsel %vm770, 1, 0
    %v772 = vsel %vm770, %v769, %v764
    %v773 = vlaneseq
    %v774 = vshrl.u32 %v773, 7
    %v775 = vsub.s32 2, %v774
    %v776 = vrot.slane %v757, %v775
    %v777 = vadd.f32 %v776, %v356
    %vm778 = vcmp.gt.f32.partialorder %v777, %v772
    %v779 = vsel %vm778, 2, %v771
    %v780 = vsel %vm778, %v777, %v772
    %v781 = vlaneseq
    %v782 = vshrl.u32 %v781, 7
    %v783 = vsub.s32 3, %v782
    %v784 = vrot.slane %v757, %v783
    %v785 = vadd.f32 %v784, %v357
    %vm786 = vcmp.gt.f32.partialorder %v785, %v780
    %v787 = vsel %vm786, 3, %v779
    %v788 = vsel %vm786, %v785, %v780
    %v789 = vlaneseq
    %v790 = vshrl.u32 %v789, 7
    %v791 = vsub.s32 4, %v790
    %v792 = vrot.slane %v757, %v791
    %v793 = vadd.f32 %v792, %v358
    %vm794 = vcmp.gt.f32.partialorder %v793, %v788
    %v795 = vsel %vm794, 4, %v787
    %v796 = vsel %vm794, %v793, %v788
    %v797 = vlaneseq
    %v798 = vshrl.u32 %v797, 7
    %v799 = vsub.s32 5, %v798
    %v800 = vrot.slane %v757, %v799
    %v801 = vadd.f32 %v800, %v359
    %vm802 = vcmp.gt.f32.partialorder %v801, %v796
    %v803 = vsel %vm802, 5, %v795
    %v804 = vsel %vm802, %v801, %v796
    %v805 = vlaneseq
    %v806 = vshrl.u32 %v805, 7
    %v807 = vsub.s32 6, %v806
    %v808 = vrot.slane %v757, %v807
    %v809 = vadd.f32 %v808, %v360
    %vm810 = vcmp.gt.f32.partialorder %v809, %v804
    %v811 = vsel %vm810, 6, %v803
    %v812 = vsel %vm810, %v809, %v804
    %s813 = scalar_lea.vmem [#allocation3], 48
    %v814 = vld [vmem:[%s813] sm:$0xff]
    %v815 = vadd.f32 %v812, %v814
    %v816 = vld [vmem:[#allocation10 + $0x6] sm:$0x1]
    %vm817 = vcmp.ne.s32.totalorder %v816, 0
    %v818 = vsel %vm817, 1, 0
    %v819 = vlaneseq
    %v820 = vshrl.u32 %v819, 7
    %v821 = vsub.s32 0, %v820
    %v822 = vrot.slane %v818, %v821
    %vm823 = vcmp.eq.s32.totalorder %v822, 1
    %v824 = vsel %vm823, %v815, %v757
    %v825 = vshll.u32 %v811, 16
    %v826 = vor.u32 %v759, %v825
    %v827 = vlaneseq
    %v828 = vshrl.u32 %v827, 7
    %v829 = vsub.s32 0, %v828
    %v830 = vrot.slane %v824, %v829
    %v831 = vadd.f32 %v830, %v354
    %v832 = vlaneseq
    %v833 = vshrl.u32 %v832, 7
    %v834 = vsub.s32 1, %v833
    %v835 = vrot.slane %v824, %v834
    %v836 = vadd.f32 %v835, %v355
    %vm837 = vcmp.gt.f32.partialorder %v836, %v831
    %v838 = vsel %vm837, 1, 0
    %v839 = vsel %vm837, %v836, %v831
    %v840 = vlaneseq
    %v841 = vshrl.u32 %v840, 7
    %v842 = vsub.s32 2, %v841
    %v843 = vrot.slane %v824, %v842
    %v844 = vadd.f32 %v843, %v356
    %vm845 = vcmp.gt.f32.partialorder %v844, %v839
    %v846 = vsel %vm845, 2, %v838
    %v847 = vsel %vm845, %v844, %v839
    %v848 = vlaneseq
    %v849 = vshrl.u32 %v848, 7
    %v850 = vsub.s32 3, %v849
    %v851 = vrot.slane %v824, %v850
    %v852 = vadd.f32 %v851, %v357
    %vm853 = vcmp.gt.f32.partialorder %v852, %v847
    %v854 = vsel %vm853, 3, %v846
    %v855 = vsel %vm853, %v852, %v847
    %v856 = vlaneseq
    %v857 = vshrl.u32 %v856, 7
    %v858 = vsub.s32 4, %v857
    %v859 = vrot.slane %v824, %v858
    %v860 = vadd.f32 %v859, %v358
    %vm861 = vcmp.gt.f32.partialorder %v860, %v855
    %v862 = vsel %vm861, 4, %v854
    %v863 = vsel %vm861, %v860, %v855
    %v864 = vlaneseq
    %v865 = vshrl.u32 %v864, 7
    %v866 = vsub.s32 5, %v865
    %v867 = vrot.slane %v824, %v866
    %v868 = vadd.f32 %v867, %v359
    %vm869 = vcmp.gt.f32.partialorder %v868, %v863
    %v870 = vsel %vm869, 5, %v862
    %v871 = vsel %vm869, %v868, %v863
    %v872 = vlaneseq
    %v873 = vshrl.u32 %v872, 7
    %v874 = vsub.s32 6, %v873
    %v875 = vrot.slane %v824, %v874
    %v876 = vadd.f32 %v875, %v360
    %vm877 = vcmp.gt.f32.partialorder %v876, %v871
    %v878 = vsel %vm877, 6, %v870
    %v879 = vsel %vm877, %v876, %v871
    %s880 = scalar_lea.vmem [#allocation3], 56
    %v881 = vld [vmem:[%s880] sm:$0xff]
    %v882 = vadd.f32 %v879, %v881
    %v883 = vld [vmem:[#allocation10 + $0x7] sm:$0x1]
    %vm884 = vcmp.ne.s32.totalorder %v883, 0
    %v885 = vsel %vm884, 1, 0
    %v886 = vlaneseq
    %v887 = vshrl.u32 %v886, 7
    %v888 = vsub.s32 0, %v887
    %v889 = vrot.slane %v885, %v888
    %vm890 = vcmp.eq.s32.totalorder %v889, 1
    %v891 = vsel %vm890, %v882, %v824
    %v892 = vshll.u32 %v878, 24
    %v893 = vor.u32 %v826, %v892
    %s894 = scalar_lea.vmem [#allocation12], 8
    %895 = vst [vmem:[%s894] sm:$0xff] %v893
    %896 = vst [vmem:[#allocation2] sm:$0xff] %v891
    // Predicated region
    $region42: #{tpu_custom_call.1} parent=1 // pred_check
      %p897 = pneg %p76
    $region43: #{tpu_custom_call.1} parent=1 // pred_check_branch
      %899 = sbr.rel (%p897) target = $region45
    $region44: #{tpu_custom_call.1} parent=1 // pred_region
      %v900 = vld [vmem:[%s3] sm:$0xff]
      %v901 = vadd.f32 %v891, %v900
      %v903 = vrot.slane %v901, 7
      %vm905 = vcmp.gt.f32.partialorder %v901, %v903
      %v906 = vsel %vm905, 1, 0
      %v907 = vsel %vm905, %v901, %v903
      %v909 = vrot.slane %v907, 7
      %vm911 = vcmp.gt.f32.partialorder %v901, %v909
      %v912 = vrot.slane %v906, 7
      %v913 = vsel %vm911, 2, %v912
      %v914 = vsel %vm911, %v901, %v909
      %v916 = vrot.slane %v914, 7
      %vm918 = vcmp.gt.f32.partialorder %v901, %v916
      %v919 = vrot.slane %v913, 7
      %v920 = vsel %vm918, 3, %v919
      %v921 = vsel %vm918, %v901, %v916
      %v923 = vrot.slane %v921, 7
      %vm925 = vcmp.gt.f32.partialorder %v901, %v923
      %v926 = vrot.slane %v920, 7
      %v927 = vsel %vm925, 4, %v926
      %v928 = vsel %vm925, %v901, %v923
      %v930 = vrot.slane %v928, 7
      %vm932 = vcmp.gt.f32.partialorder %v901, %v930
      %v933 = vrot.slane %v927, 7
      %v934 = vsel %vm932, 5, %v933
      %v935 = vsel %vm932, %v901, %v930
      %v937 = vrot.slane %v935, 7
      %vm939 = vcmp.gt.f32.partialorder %v901, %v937
      %v940 = vrot.slane %v934, 7
      %v941 = vsel %vm939, 6, %v940
      %942 = vst [vmem:[#allocation13 - $0x6] sm:$0x40] %v941
    $region45: #{tpu_custom_call.1} parent=1 // pred_fallthru
      _
    // Predicated region
    $region46: #{tpu_custom_call.1} parent=1 // pred_check
      _
    $region47: #{tpu_custom_call.1} parent=1 // pred_check_branch
      %944 = sbr.rel (0) target = $region49
    $region48: #{tpu_custom_call.1} parent=1 // pred_region
      %s946 = ssub.s32 256, 256
      %947 = vsyncadd [#allocation6], %s946
      %s948 = sshll.u32 [#allocation12], 4
      %s949 = int_to_ptr.vmem [resolvable:$true] %s948
      %954 = dma.vmem_to_hbm [thread:$0]  %s949, 256, %s5, [#allocation6], 128, 128, 8
    $region49: #{tpu_custom_call.1} parent=1 // pred_fallthru
      _
    // Predicated region
    $region50: #{tpu_custom_call.1} parent=1 // pred_check
      _
    $region51: #{tpu_custom_call.1} parent=1 // pred_check_branch
      %956 = sbr.rel (0) target = $region53
    $region52: #{tpu_custom_call.1} parent=1 // pred_region
      %s958 = ssub.s32 16, 16
      %959 = vsyncadd [#allocation14], %s958
      %s961 = sshll.u32 [#allocation13], 4
      %s962 = int_to_ptr.vmem [resolvable:$true] %s961
      %964 = dma.vmem_to_hbm [thread:$0]  %s962, 16, %s6, [#allocation14]
    $region53: #{tpu_custom_call.1} parent=1 // pred_fallthru
      _
    // Predicated region
    $region54: #{tpu_custom_call.1} parent=1 // pred_check
      _
    $region55: #{tpu_custom_call.1} parent=1 // pred_check_branch
      %966 = sbr.rel (0) target = $region57
    $region56: #{tpu_custom_call.1} parent=1 // pred_region
      %967 = dma.done [#allocation6], 256
    $region57: #{tpu_custom_call.1} parent=1 // pred_fallthru
      _
    // Predicated region
    $region58: #{tpu_custom_call.1} parent=1 // pred_check
      _
    $region59: #{tpu_custom_call.1} parent=1 // pred_check_branch
      %969 = sbr.rel (0) target = $region61
    $region60: #{tpu_custom_call.1} parent=1 // pred_region
      %970 = dma.done [#allocation14], 16
    $region61: #{tpu_custom_call.1} parent=1 // pred_fallthru
      _
    %971 = vsyncpa [#allocation5], 1
    %972 = vsyncpa [#allocation8], 1
    %973 = vsyncpa [#allocation11], 1
    %974 = vsyncpa [#allocation6], 1
    %975 = vsyncpa [#allocation14], 1

</llo_original>
